<compile_context>
chip_gen: v6e
topology: v6e:2x2x1
jax: 0.10.0
libtpu: 0.0.40
codegen_flags: <defaults>
</compile_context>

<pallas_src>
import jax
import jax.numpy as jnp
from jax.experimental import pallas as pl
from jax.experimental.pallas import tpu as pltpu


# Scaled-down but structurally identical to
# MLP([1024, 2048, 2048, 1024, 768, 512, 1]) replicated num_heads times.
MLP_DIMS = [128, 256, 256, 128, 96, 64, 1]   # per-head MLP layer widths
NUM_HEADS = 4                                # len(label_mapping) / 2
BATCH = 2


# ----------------------------------------------------------------------------
# Kernel: one grid step == one head's full MLP + sigmoid
# ----------------------------------------------------------------------------
def tag_head_kernel(x_ref, *refs):
    """refs = (W0, b0, ..., W_last, b_last, out_ref).

    x_ref   : (B, d0)            f32   (resident; same block every step)
    W_l ref : (1, d_in, d_out)   bf16  (streamed per head; last one is
                                        pre-transposed to (1, 1, d_last))
    b_l ref : (1, 1, d_out)      f32
    out_ref : (1, B, 1)          f32   this head's sigmoid logits
    """
    out_ref = refs[-1]
    wb = refs[:-1]
    n_layers = len(wb) // 2

    h = x_ref[...]                                       # (B, d0) f32
    # Hidden layers: bf16 weights fed straight to the MXU (no f32 upcast
    # copy), f32 accumulation, f32 bias + ReLU.
    for l in range(n_layers - 1):
        w = wb[2 * l][0]                                 # (d_in, d_out) bf16
        b = wb[2 * l + 1][0]                             # (1, d_out)    f32
        h = jnp.dot(h.astype(jnp.bfloat16), w,
                    preferred_element_type=jnp.float32) + b
        h = jnp.maximum(h, 0.0)

    # Final layer (d_out == 1): N=1 matmul wastes the MXU -> VPU multiply +
    # cross-lane reduce.  Weight arrives pre-transposed as (1, d_last).
    w_last = wb[-2][0].astype(jnp.float32)               # (1, d_last)
    b_last = wb[-1][0]                                   # (1, 1)
    val = jnp.sum(h * w_last, axis=-1, keepdims=True) + b_last   # (B, 1)
    out_ref[0] = 1.0 / (1.0 + jnp.exp(-val))             # sigmoid


# ----------------------------------------------------------------------------
# Wrapper
# ----------------------------------------------------------------------------
def _head_specs(dims, batch):
    """BlockSpecs: x resident, per-head weight/bias blocks streamed over grid."""
    specs = [pl.BlockSpec((batch, dims[0]), lambda h: (0, 0))]     # x
    n = len(dims) - 1
    for l in range(n):
        din, dout = dims[l], dims[l + 1]
        if l == n - 1:
            # last-layer weight is passed pre-transposed: (H, 1, d_last)
            specs.append(pl.BlockSpec((1, 1, din), lambda h: (h, 0, 0)))
        else:
            specs.append(pl.BlockSpec((1, din, dout), lambda h: (h, 0, 0)))
        specs.append(pl.BlockSpec((1, 1, dout), lambda h: (h, 0, 0)))  # bias
    return specs


def _vmem_limit_bytes(dims, batch):
    """Double-buffered per-head blocks + resident x + slack, clamped sanely."""
    per_head = 0
    for l in range(len(dims) - 1):
        per_head += dims[l] * dims[l + 1] * 2            # bf16 weights
        per_head += dims[l + 1] * 4                      # f32 bias
    need = 2 * per_head + 2 * batch * dims[0] * 4 + (4 << 20)
    return int(min(max(need, 16 << 20), 96 << 20))


def tag_generator_forward(embeddings, params, y=None):
    """Mirrors TagGenerator.forward(x, y) semantics, consuming CLS embeddings.

    params: list of (W, b) with W: (H, d_in, d_out) bf16, b: (H, 1, d_out) f32.
    """
    B, d0 = embeddings.shape
    H = params[0][0].shape[0]
    dims = [params[0][0].shape[1]] + [W.shape[2] for W, _ in params]
    assert d0 == dims[0]

    # Flatten params; pre-transpose the final (H, d_last, 1) weight to
    # (H, 1, d_last) once in the wrapper (layout plumbing only).
    flat = []
    n = len(params)
    for l, (W, b) in enumerate(params):
        if l == n - 1:
            W = jnp.swapaxes(W, 1, 2)
        flat.append(W)
        flat.append(b)

    per_head = pl.pallas_call(
        tag_head_kernel,
        out_shape=jax.ShapeDtypeStruct((H, B, 1), jnp.float32),
        grid=(H,),
        in_specs=_head_specs(dims, B),
        out_specs=pl.BlockSpec((1, B, 1), lambda h: (h, 0, 0)),
        compiler_params=pltpu.CompilerParams(
            dimension_semantics=("parallel",),
            vmem_limit_bytes=_vmem_limit_bytes(dims, B),
        ),
    )(embeddings.astype(jnp.float32), *flat)

    logits = per_head[:, :, 0].T                         # (B, H), tiny reshape

    if y is None:
        return logits
    # torch: loss = sum(log|((1 - y) - sigmoid)|) / (B*H); return -loss.
    # (log|s| -> -inf when sigmoid == 1 - y, exactly as in the reference math.)
    s = (1.0 - y.astype(jnp.float32)) - logits
    return -(jnp.sum(jnp.log(jnp.abs(s))) / (y.shape[0] * y.shape[1]))


# ----------------------------------------------------------------------------
# Deterministic parameter init + pure-JAX reference (same bf16 numerics)
# ----------------------------------------------------------------------------
def init_params(key, dims, num_heads):
    """Weights in bf16 (as the torch module loads them), biases in f32."""
    params = []
    for l in range(len(dims) - 1):
        key, kw, kb = jax.random.split(key, 3)
        din, dout = dims[l], dims[l + 1]
        W = (jax.random.normal(kw, (num_heads, din, dout), jnp.float32)
             / jnp.sqrt(din)).astype(jnp.bfloat16)
        b = 0.01 * jax.random.normal(kb, (num_heads, 1, dout), jnp.float32)
        params.append((W, b))
    return params


def reference_forward(embeddings, params, y=None):
    H = params[0][0].shape[0]
    n = len(params)
    cols = []
    for h in range(H):
        a = embeddings.astype(jnp.float32)
        for l, (W, b) in enumerate(params):
            if l < n - 1:
                a = jnp.dot(a.astype(jnp.bfloat16), W[h],
                            preferred_element_type=jnp.float32) + b[h]
                a = jnp.maximum(a, 0.0)
            else:
                w_last = W[h].astype(jnp.float32)        # (d_last, 1)
                a = jnp.sum(a * w_last.reshape(1, -1),
                            axis=-1, keepdims=True) + b[h]
        cols.append(a)                                   # (B, 1)
    logits = jax.nn.sigmoid(jnp.concatenate(cols, axis=1))
    if y is None:
        return logits
    s = (1.0 - y) - logits
    return -(jnp.sum(jnp.log(jnp.abs(s))) / (y.shape[0] * y.shape[1]))


if __name__ == "__main__":
    key = jax.random.PRNGKey(0)
    k_emb, k_y, k_par = jax.random.split(key, 3)

    embeddings = jax.random.normal(k_emb, (BATCH, MLP_DIMS[0]), jnp.float32)
    y = jax.random.bernoulli(k_y, 0.5, (BATCH, NUM_HEADS)).astype(jnp.float32)
    params = init_params(k_par, MLP_DIMS, NUM_HEADS)

    # Inference path (y is None): sigmoid logits (B, H).
    logits = jax.block_until_ready(tag_generator_forward(embeddings, params, y=None))

    # Training path: scalar -mean(log|1 - y - logits|).
    loss = jax.block_until_ready(tag_generator_forward(embeddings, params, y=y))

    # Correctness check against a pure-JAX reference with matching numerics.
    ref_logits = reference_forward(embeddings, params, y=None)
    ref_loss = reference_forward(embeddings, params, y=y)
    assert jnp.allclose(logits, ref_logits, rtol=1e-3, atol=1e-4), "logits mismatch"
    assert jnp.allclose(loss, ref_loss, rtol=1e-3, atol=1e-3), "loss mismatch"

    print("KERNEL_OK")
</pallas_src>

<mosaic_0001>
module attributes {stable_mosaic.version = 11 : i64} {
  func.func @tag_head_kernel(%arg0: i32, %arg1: memref<2x128xf32, #tpu.memory_space<vmem>>, %arg2: memref<1x128x256xbf16, #tpu.memory_space<vmem>>, %arg3: memref<1x1x256xf32, #tpu.memory_space<vmem>>, %arg4: memref<1x256x256xbf16, #tpu.memory_space<vmem>>, %arg5: memref<1x1x256xf32, #tpu.memory_space<vmem>>, %arg6: memref<1x256x128xbf16, #tpu.memory_space<vmem>>, %arg7: memref<1x1x128xf32, #tpu.memory_space<vmem>>, %arg8: memref<1x128x96xbf16, #tpu.memory_space<vmem>>, %arg9: memref<1x1x96xf32, #tpu.memory_space<vmem>>, %arg10: memref<1x96x64xbf16, #tpu.memory_space<vmem>>, %arg11: memref<1x1x64xf32, #tpu.memory_space<vmem>>, %arg12: memref<1x1x64xbf16, #tpu.memory_space<vmem>>, %arg13: memref<1x1x1xf32, #tpu.memory_space<vmem>>, %arg14: memref<1x2x1xf32, #tpu.memory_space<vmem>>) attributes {dimension_semantics = [#tpu.dimension_semantics<parallel>], iteration_bounds = array<i64: 4>, scalar_prefetch = 0 : i64, scratch_operands = 0 : i64, tpu.core_type = #tpu.core_type<tc>, window_params = [{pipeline_mode = #tpu.pipeline_mode<synchronous>, transform_indices = @transform_0, window_bounds = array<i64: 2, 128>}, {transform_indices = @transform_1, window_bounds = array<i64: 1, 128, 256>}, {transform_indices = @transform_2, window_bounds = array<i64: 1, 1, 256>}, {transform_indices = @transform_3, window_bounds = array<i64: 1, 256, 256>}, {transform_indices = @transform_4, window_bounds = array<i64: 1, 1, 256>}, {transform_indices = @transform_5, window_bounds = array<i64: 1, 256, 128>}, {transform_indices = @transform_6, window_bounds = array<i64: 1, 1, 128>}, {transform_indices = @transform_7, window_bounds = array<i64: 1, 128, 96>}, {transform_indices = @transform_8, window_bounds = array<i64: 1, 1, 96>}, {transform_indices = @transform_9, window_bounds = array<i64: 1, 96, 64>}, {transform_indices = @transform_10, window_bounds = array<i64: 1, 1, 64>}, {transform_indices = @transform_11, window_bounds = array<i64: 1, 1, 64>}, {transform_indices = @transform_12, window_bounds = array<i64: 1, 1, 1>}, {transform_indices = @transform_13, window_bounds = array<i64: 1, 2, 1>}]} {
    %c0 = arith.constant 0 : index
    %c0_0 = arith.constant 0 : index
    %0 = vector.load %arg1[%c0, %c0_0] : memref<2x128xf32, #tpu.memory_space<vmem>>, vector<2x128xf32>
    %c0_1 = arith.constant 0 : index
    %c0_2 = arith.constant 0 : index
    %c0_3 = arith.constant 0 : index
    %1 = vector.load %arg2[%c0_1, %c0_2, %c0_3] : memref<1x128x256xbf16, #tpu.memory_space<vmem>>, vector<1x128x256xbf16>
    %2 = vector.shape_cast %1 : vector<1x128x256xbf16> to vector<128x256xbf16>
    %c0_4 = arith.constant 0 : index
    %c0_5 = arith.constant 0 : index
    %c0_6 = arith.constant 0 : index
    %3 = vector.load %arg3[%c0_4, %c0_5, %c0_6] : memref<1x1x256xf32, #tpu.memory_space<vmem>>, vector<1x1x256xf32>
    %4 = vector.shape_cast %3 : vector<1x1x256xf32> to vector<1x256xf32>
    %5 = arith.truncf %0 : vector<2x128xf32> to vector<2x128xbf16>
    %cst = arith.constant dense<0.000000e+00> : vector<2x256xf32>
    %6 = tpu.matmul %5, %2, %cst {dimension_numbers = #tpu.dot_dimension_numbers<[1], [0], [0], [1], [0, 0, 1, 1], [], []>} : vector<2x128xbf16>, vector<128x256xbf16>, vector<2x256xf32> -> vector<2x256xf32>
    %7 = vector.broadcast %4 : vector<1x256xf32> to vector<2x256xf32>
    %8 = arith.addf %6, %7 : vector<2x256xf32>
    %cst_7 = arith.constant 0.000000e+00 : f32
    %9 = vector.broadcast %cst_7 : f32 to vector<2x256xf32>
    %10 = arith.maximumf %8, %9 : vector<2x256xf32>
    %c0_8 = arith.constant 0 : index
    %c0_9 = arith.constant 0 : index
    %c0_10 = arith.constant 0 : index
    %11 = vector.load %arg4[%c0_8, %c0_9, %c0_10] : memref<1x256x256xbf16, #tpu.memory_space<vmem>>, vector<1x256x256xbf16>
    %12 = vector.shape_cast %11 : vector<1x256x256xbf16> to vector<256x256xbf16>
    %c0_11 = arith.constant 0 : index
    %c0_12 = arith.constant 0 : index
    %c0_13 = arith.constant 0 : index
    %13 = vector.load %arg5[%c0_11, %c0_12, %c0_13] : memref<1x1x256xf32, #tpu.memory_space<vmem>>, vector<1x1x256xf32>
    %14 = vector.shape_cast %13 : vector<1x1x256xf32> to vector<1x256xf32>
    %15 = arith.truncf %10 : vector<2x256xf32> to vector<2x256xbf16>
    %cst_14 = arith.constant dense<0.000000e+00> : vector<2x256xf32>
    %16 = tpu.matmul %15, %12, %cst_14 {dimension_numbers = #tpu.dot_dimension_numbers<[1], [0], [0], [1], [0, 0, 1, 1], [], []>} : vector<2x256xbf16>, vector<256x256xbf16>, vector<2x256xf32> -> vector<2x256xf32>
    %17 = vector.broadcast %14 : vector<1x256xf32> to vector<2x256xf32>
    %18 = arith.addf %16, %17 : vector<2x256xf32>
    %cst_15 = arith.constant 0.000000e+00 : f32
    %19 = vector.broadcast %cst_15 : f32 to vector<2x256xf32>
    %20 = arith.maximumf %18, %19 : vector<2x256xf32>
    %c0_16 = arith.constant 0 : index
    %c0_17 = arith.constant 0 : index
    %c0_18 = arith.constant 0 : index
    %21 = vector.load %arg6[%c0_16, %c0_17, %c0_18] : memref<1x256x128xbf16, #tpu.memory_space<vmem>>, vector<1x256x128xbf16>
    %22 = vector.shape_cast %21 : vector<1x256x128xbf16> to vector<256x128xbf16>
    %c0_19 = arith.constant 0 : index
    %c0_20 = arith.constant 0 : index
    %c0_21 = arith.constant 0 : index
    %23 = vector.load %arg7[%c0_19, %c0_20, %c0_21] : memref<1x1x128xf32, #tpu.memory_space<vmem>>, vector<1x1x128xf32>
    %24 = vector.shape_cast %23 : vector<1x1x128xf32> to vector<1x128xf32>
    %25 = arith.truncf %20 : vector<2x256xf32> to vector<2x256xbf16>
    %cst_22 = arith.constant dense<0.000000e+00> : vector<2x128xf32>
    %26 = tpu.matmul %25, %22, %cst_22 {dimension_numbers = #tpu.dot_dimension_numbers<[1], [0], [0], [1], [0, 0, 1, 1], [], []>} : vector<2x256xbf16>, vector<256x128xbf16>, vector<2x128xf32> -> vector<2x128xf32>
    %27 = vector.broadcast %24 : vector<1x128xf32> to vector<2x128xf32>
    %28 = arith.addf %26, %27 : vector<2x128xf32>
    %cst_23 = arith.constant 0.000000e+00 : f32
    %29 = vector.broadcast %cst_23 : f32 to vector<2x128xf32>
    %30 = arith.maximumf %28, %29 : vector<2x128xf32>
    %c0_24 = arith.constant 0 : index
    %c0_25 = arith.constant 0 : index
    %c0_26 = arith.constant 0 : index
    %31 = vector.load %arg8[%c0_24, %c0_25, %c0_26] : memref<1x128x96xbf16, #tpu.memory_space<vmem>>, vector<1x128x96xbf16>
    %32 = vector.shape_cast %31 : vector<1x128x96xbf16> to vector<128x96xbf16>
    %c0_27 = arith.constant 0 : index
    %c0_28 = arith.constant 0 : index
    %c0_29 = arith.constant 0 : index
    %33 = vector.load %arg9[%c0_27, %c0_28, %c0_29] : memref<1x1x96xf32, #tpu.memory_space<vmem>>, vector<1x1x96xf32>
    %34 = vector.shape_cast %33 : vector<1x1x96xf32> to vector<1x96xf32>
    %35 = arith.truncf %30 : vector<2x128xf32> to vector<2x128xbf16>
    %cst_30 = arith.constant dense<0.000000e+00> : vector<2x96xf32>
    %36 = tpu.matmul %35, %32, %cst_30 {dimension_numbers = #tpu.dot_dimension_numbers<[1], [0], [0], [1], [0, 0, 1, 1], [], []>} : vector<2x128xbf16>, vector<128x96xbf16>, vector<2x96xf32> -> vector<2x96xf32>
    %37 = vector.broadcast %34 : vector<1x96xf32> to vector<2x96xf32>
    %38 = arith.addf %36, %37 : vector<2x96xf32>
    %cst_31 = arith.constant 0.000000e+00 : f32
    %39 = vector.broadcast %cst_31 : f32 to vector<2x96xf32>
    %40 = arith.maximumf %38, %39 : vector<2x96xf32>
    %c0_32 = arith.constant 0 : index
    %c0_33 = arith.constant 0 : index
    %c0_34 = arith.constant 0 : index
    %41 = vector.load %arg10[%c0_32, %c0_33, %c0_34] : memref<1x96x64xbf16, #tpu.memory_space<vmem>>, vector<1x96x64xbf16>
    %42 = vector.shape_cast %41 : vector<1x96x64xbf16> to vector<96x64xbf16>
    %c0_35 = arith.constant 0 : index
    %c0_36 = arith.constant 0 : index
    %c0_37 = arith.constant 0 : index
    %43 = vector.load %arg11[%c0_35, %c0_36, %c0_37] : memref<1x1x64xf32, #tpu.memory_space<vmem>>, vector<1x1x64xf32>
    %44 = vector.shape_cast %43 : vector<1x1x64xf32> to vector<1x64xf32>
    %45 = arith.truncf %40 : vector<2x96xf32> to vector<2x96xbf16>
    %cst_38 = arith.constant dense<0.000000e+00> : vector<2x64xf32>
    %46 = tpu.matmul %45, %42, %cst_38 {dimension_numbers = #tpu.dot_dimension_numbers<[1], [0], [0], [1], [0, 0, 1, 1], [], []>} : vector<2x96xbf16>, vector<96x64xbf16>, vector<2x64xf32> -> vector<2x64xf32>
    %47 = vector.broadcast %44 : vector<1x64xf32> to vector<2x64xf32>
    %48 = arith.addf %46, %47 : vector<2x64xf32>
    %cst_39 = arith.constant 0.000000e+00 : f32
    %49 = vector.broadcast %cst_39 : f32 to vector<2x64xf32>
    %50 = arith.maximumf %48, %49 : vector<2x64xf32>
    %c0_40 = arith.constant 0 : index
    %c0_41 = arith.constant 0 : index
    %c0_42 = arith.constant 0 : index
    %51 = vector.load %arg12[%c0_40, %c0_41, %c0_42] : memref<1x1x64xbf16, #tpu.memory_space<vmem>>, vector<1x1x64xbf16>
    %52 = vector.shape_cast %51 : vector<1x1x64xbf16> to vector<1x64xbf16>
    %53 = arith.extf %52 : vector<1x64xbf16> to vector<1x64xf32>
    %c0_43 = arith.constant 0 : index
    %c0_44 = arith.constant 0 : index
    %c0_45 = arith.constant 0 : index
    %54 = vector.load %arg13[%c0_43, %c0_44, %c0_45] : memref<1x1x1xf32, #tpu.memory_space<vmem>>, vector<1x1x1xf32>
    %55 = vector.shape_cast %54 : vector<1x1x1xf32> to vector<1x1xf32>
    %56 = vector.broadcast %53 : vector<1x64xf32> to vector<2x64xf32>
    %57 = arith.mulf %50, %56 : vector<2x64xf32>
    %cst_46 = arith.constant dense<0.000000e+00> : vector<2xf32>
    %58 = vector.multi_reduction <add>, %57, %cst_46 [1] : vector<2x64xf32> to vector<2xf32>
    %59 = vector.shape_cast %58 : vector<2xf32> to vector<2x1xf32>
    %60 = vector.broadcast %55 : vector<1x1xf32> to vector<2x1xf32>
    %61 = arith.addf %59, %60 : vector<2x1xf32>
    %cst_47 = arith.constant 0.000000e+00 : f32
    %62 = vector.broadcast %cst_47 : f32 to vector<2x1xf32>
    %63 = arith.subf %62, %61 : vector<2x1xf32>
    %64 = math.exp %63 : vector<2x1xf32>
    %cst_48 = arith.constant 1.000000e+00 : f32
    %65 = vector.broadcast %cst_48 : f32 to vector<2x1xf32>
    %66 = arith.addf %65, %64 : vector<2x1xf32>
    %cst_49 = arith.constant 1.000000e+00 : f32
    %67 = vector.broadcast %cst_49 : f32 to vector<2x1xf32>
    %68 = arith.divf %67, %66 : vector<2x1xf32>
    %c0_50 = arith.constant 0 : index
    %c0_51 = arith.constant 0 : index
    %c0_52 = arith.constant 0 : index
    %69 = vector.load %arg14[%c0_50, %c0_51, %c0_52] : memref<1x2x1xf32, #tpu.memory_space<vmem>>, vector<1x2x1xf32>
    %70 = vector.shape_cast %69 : vector<1x2x1xf32> to vector<2x1xf32>
    %71 = vector.shape_cast %68 : vector<2x1xf32> to vector<1x2x1xf32>
    tpu.vector_store %arg14[%c0_50, %c0_51, %c0_52], %71 {strides = array<i32>} : memref<1x2x1xf32, #tpu.memory_space<vmem>>, vector<1x2x1xf32>,
    return
  }
  func.func @transform_0(%arg0: i32) -> (i32, i32) {
    %c0_i32 = arith.constant 0 : i32
    %c0_i32_0 = arith.constant 0 : i32
    %c0_i32_1 = arith.constant 0 : i32
    return %c0_i32, %c0_i32_0 : i32, i32
  }
  func.func @transform_1(%arg0: i32) -> (i32, i32, i32) {
    %c0_i32 = arith.constant 0 : i32
    %c0_i32_0 = arith.constant 0 : i32
    %c0_i32_1 = arith.constant 0 : i32
    return %arg0, %c0_i32, %c0_i32_0 : i32, i32, i32
  }
  func.func @transform_2(%arg0: i32) -> (i32, i32, i32) {
    %c0_i32 = arith.constant 0 : i32
    %c0_i32_0 = arith.constant 0 : i32
    %c0_i32_1 = arith.constant 0 : i32
    return %arg0, %c0_i32, %c0_i32_0 : i32, i32, i32
  }
  func.func @transform_3(%arg0: i32) -> (i32, i32, i32) {
    %c0_i32 = arith.constant 0 : i32
    %c0_i32_0 = arith.constant 0 : i32
    %c0_i32_1 = arith.constant 0 : i32
    return %arg0, %c0_i32, %c0_i32_0 : i32, i32, i32
  }
  func.func @transform_4(%arg0: i32) -> (i32, i32, i32) {
    %c0_i32 = arith.constant 0 : i32
    %c0_i32_0 = arith.constant 0 : i32
    %c0_i32_1 = arith.constant 0 : i32
    return %arg0, %c0_i32, %c0_i32_0 : i32, i32, i32
  }
  func.func @transform_5(%arg0: i32) -> (i32, i32, i32) {
    %c0_i32 = arith.constant 0 : i32
    %c0_i32_0 = arith.constant 0 : i32
    %c0_i32_1 = arith.constant 0 : i32
    return %arg0, %c0_i32, %c0_i32_0 : i32, i32, i32
  }
  func.func @transform_6(%arg0: i32) -> (i32, i32, i32) {
    %c0_i32 = arith.constant 0 : i32
    %c0_i32_0 = arith.constant 0 : i32
    %c0_i32_1 = arith.constant 0 : i32
    return %arg0, %c0_i32, %c0_i32_0 : i32, i32, i32
  }
  func.func @transform_7(%arg0: i32) -> (i32, i32, i32) {
    %c0_i32 = arith.constant 0 : i32
    %c0_i32_0 = arith.constant 0 : i32
    %c0_i32_1 = arith.constant 0 : i32
    return %arg0, %c0_i32, %c0_i32_0 : i32, i32, i32
  }
  func.func @transform_8(%arg0: i32) -> (i32, i32, i32) {
    %c0_i32 = arith.constant 0 : i32
    %c0_i32_0 = arith.constant 0 : i32
    %c0_i32_1 = arith.constant 0 : i32
    return %arg0, %c0_i32, %c0_i32_0 : i32, i32, i32
  }
  func.func @transform_9(%arg0: i32) -> (i32, i32, i32) {
    %c0_i32 = arith.constant 0 : i32
    %c0_i32_0 = arith.constant 0 : i32
    %c0_i32_1 = arith.constant 0 : i32
    return %arg0, %c0_i32, %c0_i32_0 : i32, i32, i32
  }
  func.func @transform_10(%arg0: i32) -> (i32, i32, i32) {
    %c0_i32 = arith.constant 0 : i32
    %c0_i32_0 = arith.constant 0 : i32
    %c0_i32_1 = arith.constant 0 : i32
    return %arg0, %c0_i32, %c0_i32_0 : i32, i32, i32
  }
  func.func @transform_11(%arg0: i32) -> (i32, i32, i32) {
    %c0_i32 = arith.constant 0 : i32
    %c0_i32_0 = arith.constant 0 : i32
    %c0_i32_1 = arith.constant 0 : i32
    return %arg0, %c0_i32, %c0_i32_0 : i32, i32, i32
  }
  func.func @transform_12(%arg0: i32) -> (i32, i32, i32) {
    %c0_i32 = arith.constant 0 : i32
    %c0_i32_0 = arith.constant 0 : i32
    %c0_i32_1 = arith.constant 0 : i32
    return %arg0, %c0_i32, %c0_i32_0 : i32, i32, i32
  }
  func.func @transform_13(%arg0: i32) -> (i32, i32, i32) {
    %c0_i32 = arith.constant 0 : i32
    %c0_i32_0 = arith.constant 0 : i32
    %c0_i32_1 = arith.constant 0 : i32
    return %arg0, %c0_i32, %c0_i32_0 : i32, i32, i32
  }
}

</mosaic_0001>

<llo_original>
// kernel: tpu_custom_call.1
$region0: #{tpu_custom_call.1}
  #allocation0 [shape = 'u32[]', space=smem, size = 0x4, offset = 0x4, fixed_abs, tag = 'smem constant byte address 0x4 - core index']
  #allocation1 [shape = 'u32[144,128]{1,0:T(1,128)}', space=vmem, size = 0x12000, scoped, tag = 'internal scratch']
  %s0 = inlined_call_operand.vmem [shape: f32[2,128], index: 0, kind: input, shape index: {}]
  %s1 = inlined_call_operand.vmem [shape: bf16[4,128,256], index: 1, kind: input, shape index: {}]
  %s2 = inlined_call_operand.vmem [shape: f32[4,1,256], index: 2, kind: input, shape index: {}]
  %s3 = inlined_call_operand.hbm [shape: bf16[4,256,256], index: 3, kind: input, shape index: {}]
  %s4 = inlined_call_operand.vmem [shape: f32[4,1,256], index: 4, kind: input, shape index: {}]
  %s5 = inlined_call_operand.hbm [shape: bf16[4,256,128], index: 5, kind: input, shape index: {}]
  %s6 = inlined_call_operand.vmem [shape: f32[4,1,128], index: 6, kind: input, shape index: {}]
  %s7 = inlined_call_operand.vmem [shape: bf16[4,128,96], index: 7, kind: input, shape index: {}]
  %s8 = inlined_call_operand.vmem [shape: f32[4,1,96], index: 8, kind: input, shape index: {}]
  %s9 = inlined_call_operand.vmem [shape: bf16[4,96,64], index: 9, kind: input, shape index: {}]
  %s10 = inlined_call_operand.vmem [shape: f32[4,1,64], index: 10, kind: input, shape index: {}]
  %s11 = inlined_call_operand.vmem [shape: bf16[4,1,64], index: 11, kind: input, shape index: {}]
  %s12 = inlined_call_operand.vmem [shape: f32[4,1,1], index: 12, kind: input, shape index: {}]
  %s13 = inlined_call_operand.vmem [shape: f32[4,2,1], index: 13, kind: output, shape index: {}]
  %s14 = sld [smem:[#allocation0]]
  $region93: #{tpu_custom_call.1} parent=0
    _
  %s16 = ssub.s32 1, %s14
  %s17 = scalar_select 0, %s16, %s14
  $region1: #{tpu_custom_call.1} parent=0
    #allocation2 [shape = 'u8[262144]{0}', space=vmem, size = 0x40000, scoped, tag = 'input window, operand 3']
    #allocation3 [shape = 's32[2]{0}', space=sflag, size = 0x8, scoped, tag = 'scoped memory for tpu_custom_call.1']
    #allocation4 [shape = 'u8[131072]{0}', space=vmem, size = 0x20000, scoped, tag = 'input window, operand 5']
    #allocation5 [shape = 's32[2]{0}', space=sflag, size = 0x8, scoped, tag = 'scoped memory for tpu_custom_call.1']
    %18 = vsyncpa [#allocation3], 0
    %s19 = scalar_lea.sflag [#allocation3], 1
    %20 = vsyncpa %s19, 0
    %21 = vsyncpa [#allocation5], 0
    %s22 = scalar_lea.sflag [#allocation5], 1
    %23 = vsyncpa %s22, 0
    loop: start=0, step=1, limit=6
    $region2: #{tpu_custom_call.1} parent=1 // loop_pre_header
      _
    $region3: #{tpu_custom_call.1} parent=1 // loop_header
      %s25 = sphi 0, %s29
      %p26 = scmp.ge.s32.totalorder %s25, 6
      %s33 = sphi 0, %s33
      %s35 = sphi 0, %s33
      %s36 = sphi 0, %s35
      %s50 = sphi 0, %s36
      %s56 = sphi 0, %s58
      %s59 = sphi 0, %s56
      %s60 = sphi 0, %s59
      %s76 = sphi 0, %s60
      %s82 = sphi 0, %s84
      %s85 = sphi 0, %s82
      %s86 = sphi 0, %s85
      %s102 = sphi 0, %s86
      %s108 = sphi 0, %s110
      %s111 = sphi 0, %s108
      %s112 = sphi 0, %s111
      %s128 = sphi 0, %s112
      %s134 = sphi 0, %s136
      %s137 = sphi 0, %s134
      %s138 = sphi 0, %s137
      %s154 = sphi 0, %s138
      %s160 = sphi 0, %s162
      %s163 = sphi 0, %s160
      %s164 = sphi 0, %s163
      %s180 = sphi 0, %s164
      %s186 = sphi 0, %s188
      %s189 = sphi 0, %s186
      %s190 = sphi 0, %s189
      %s206 = sphi 0, %s190
      %s212 = sphi 0, %s214
      %s215 = sphi 0, %s212
      %s216 = sphi 0, %s215
      %s232 = sphi 0, %s216
      %s238 = sphi 0, %s240
      %s241 = sphi 0, %s238
      %s242 = sphi 0, %s241
      %s258 = sphi 0, %s242
      %s264 = sphi 0, %s266
      %s267 = sphi 0, %s264
      %s268 = sphi 0, %s267
      %s284 = sphi 0, %s268
      %s290 = sphi 0, %s292
      %s293 = sphi 0, %s290
      %s294 = sphi 0, %s293
      %s310 = sphi 0, %s294
      %s316 = sphi 0, %s318
      %s319 = sphi 0, %s316
      %s320 = sphi 0, %s319
      %s336 = sphi 0, %s320
      %s342 = sphi 0, %s344
      %s345 = sphi 0, %s342
      %s346 = sphi 0, %s345
      %s362 = sphi 0, %s346
      %s368 = sphi 0, %s370
      %s371 = sphi 0, %s368
      %s372 = sphi 0, %s371
      %s388 = sphi 0, %s372
    $region4: #{tpu_custom_call.1} parent=1 // loop_header_branch
      %28 = sbr.rel (%p26) target = $region8
    $region5: #{tpu_custom_call.1} parent=1 // loop_body
      %s30 = ssub.s32 %s25, 1
      %s31 = ssub.s32 %s25, 2
      %s32 = sadd.s32 %s25, 1
      %s34 = sadd.s32 %s33, 1
      %p37 = scmp.eq.s32.totalorder %s25, 3
      %p38 = scmp.ne.s32.totalorder %s33, %s35
      %p39 = scmp.eq.s32.totalorder %s25, 0
      %p40 = por %p38, %p39
      %p41 = scmp.ne.s32.totalorder %s33, %s35
      %p42 = scmp.eq.s32.totalorder %s30, 3
      %p43 = por %p41, %p42
      %p44 = scmp.ne.s32.totalorder %s35, %s36
      %p45 = scmp.eq.s32.totalorder %s30, 0
      %p46 = por %p44, %p45
      %p47 = scmp.ne.s32.totalorder %s35, %s36
      %p48 = scmp.eq.s32.totalorder %s31, 3
      %p49 = por %p47, %p48
      %p51 = scmp.ne.s32.totalorder %s36, %s50
      %p52 = scmp.eq.s32.totalorder %s31, 0
      %p53 = por %p51, %p52
      %s54 = ssub.s32 %s25, %s32
      %p55 = scmp.eq.s32.totalorder %s54, 0
      %s57 = sadd.s32 %s56, 1
      %s58 = scalar_select %p55, %s56, %s57
      %p61 = pneg %p55
      %p62 = scmp.eq.s32.totalorder %s25, 3
      %p63 = por %p61, %p62
      %p64 = scmp.ne.s32.totalorder %s56, %s59
      %p65 = scmp.eq.s32.totalorder %s25, 0
      %p66 = por %p64, %p65
      %p67 = scmp.ne.s32.totalorder %s56, %s59
      %p68 = scmp.eq.s32.totalorder %s30, 3
      %p69 = por %p67, %p68
      %p70 = scmp.ne.s32.totalorder %s59, %s60
      %p71 = scmp.eq.s32.totalorder %s30, 0
      %p72 = por %p70, %p71
      %p73 = scmp.ne.s32.totalorder %s59, %s60
      %p74 = scmp.eq.s32.totalorder %s31, 3
      %p75 = por %p73, %p74
      %p77 = scmp.ne.s32.totalorder %s60, %s76
      %p78 = scmp.eq.s32.totalorder %s31, 0
      %p79 = por %p77, %p78
      %s80 = ssub.s32 %s25, %s32
      %p81 = scmp.eq.s32.totalorder %s80, 0
      %s83 = sadd.s32 %s82, 1
      %s84 = scalar_select %p81, %s82, %s83
      %p87 = pneg %p81
      %p88 = scmp.eq.s32.totalorder %s25, 3
      %p89 = por %p87, %p88
      %p90 = scmp.ne.s32.totalorder %s82, %s85
      %p91 = scmp.eq.s32.totalorder %s25, 0
      %p92 = por %p90, %p91
      %p93 = scmp.ne.s32.totalorder %s82, %s85
      %p94 = scmp.eq.s32.totalorder %s30, 3
      %p95 = por %p93, %p94
      %p96 = scmp.ne.s32.totalorder %s85, %s86
      %p97 = scmp.eq.s32.totalorder %s30, 0
      %p98 = por %p96, %p97
      %p99 = scmp.ne.s32.totalorder %s85, %s86
      %p100 = scmp.eq.s32.totalorder %s31, 3
      %p101 = por %p99, %p100
      %p103 = scmp.ne.s32.totalorder %s86, %s102
      %p104 = scmp.eq.s32.totalorder %s31, 0
      %p105 = por %p103, %p104
      %s106 = ssub.s32 %s25, %s32
      %p107 = scmp.eq.s32.totalorder %s106, 0
      %s109 = sadd.s32 %s108, 1
      %s110 = scalar_select %p107, %s108, %s109
      %p113 = pneg %p107
      %p114 = scmp.eq.s32.totalorder %s25, 3
      %p115 = por %p113, %p114
      %p116 = scmp.ne.s32.totalorder %s108, %s111
      %p117 = scmp.eq.s32.totalorder %s25, 0
      %p118 = por %p116, %p117
      %p119 = scmp.ne.s32.totalorder %s108, %s111
      %p120 = scmp.eq.s32.totalorder %s30, 3
      %p121 = por %p119, %p120
      %p122 = scmp.ne.s32.totalorder %s111, %s112
      %p123 = scmp.eq.s32.totalorder %s30, 0
      %p124 = por %p122, %p123
      %p125 = scmp.ne.s32.totalorder %s111, %s112
      %p126 = scmp.eq.s32.totalorder %s31, 3
      %p127 = por %p125, %p126
      %p129 = scmp.ne.s32.totalorder %s112, %s128
      %p130 = scmp.eq.s32.totalorder %s31, 0
      %p131 = por %p129, %p130
      %s132 = ssub.s32 %s25, %s32
      %p133 = scmp.eq.s32.totalorder %s132, 0
      %s135 = sadd.s32 %s134, 1
      %s136 = scalar_select %p133, %s134, %s135
      %p139 = pneg %p133
      %p140 = scmp.eq.s32.totalorder %s25, 3
      %p141 = por %p139, %p140
      %p142 = scmp.ne.s32.totalorder %s134, %s137
      %p143 = scmp.eq.s32.totalorder %s25, 0
      %p144 = por %p142, %p143
      %p145 = scmp.ne.s32.totalorder %s134, %s137
      %p146 = scmp.eq.s32.totalorder %s30, 3
      %p147 = por %p145, %p146
      %p148 = scmp.ne.s32.totalorder %s137, %s138
      %p149 = scmp.eq.s32.totalorder %s30, 0
      %p150 = por %p148, %p149
      %p151 = scmp.ne.s32.totalorder %s137, %s138
      %p152 = scmp.eq.s32.totalorder %s31, 3
      %p153 = por %p151, %p152
      %p155 = scmp.ne.s32.totalorder %s138, %s154
      %p156 = scmp.eq.s32.totalorder %s31, 0
      %p157 = por %p155, %p156
      %s158 = ssub.s32 %s25, %s32
      %p159 = scmp.eq.s32.totalorder %s158, 0
      %s161 = sadd.s32 %s160, 1
      %s162 = scalar_select %p159, %s160, %s161
      %p165 = pneg %p159
      %p166 = scmp.eq.s32.totalorder %s25, 3
      %p167 = por %p165, %p166
      %p168 = scmp.ne.s32.totalorder %s160, %s163
      %p169 = scmp.eq.s32.totalorder %s25, 0
      %p170 = por %p168, %p169
      %p171 = scmp.ne.s32.totalorder %s160, %s163
      %p172 = scmp.eq.s32.totalorder %s30, 3
      %p173 = por %p171, %p172
      %p174 = scmp.ne.s32.totalorder %s163, %s164
      %p175 = scmp.eq.s32.totalorder %s30, 0
      %p176 = por %p174, %p175
      %p177 = scmp.ne.s32.totalorder %s163, %s164
      %p178 = scmp.eq.s32.totalorder %s31, 3
      %p179 = por %p177, %p178
      %p181 = scmp.ne.s32.totalorder %s164, %s180
      %p182 = scmp.eq.s32.totalorder %s31, 0
      %p183 = por %p181, %p182
      %s184 = ssub.s32 %s25, %s32
      %p185 = scmp.eq.s32.totalorder %s184, 0
      %s187 = sadd.s32 %s186, 1
      %s188 = scalar_select %p185, %s186, %s187
      %p191 = pneg %p185
      %p192 = scmp.eq.s32.totalorder %s25, 3
      %p193 = por %p191, %p192
      %p194 = scmp.ne.s32.totalorder %s186, %s189
      %p195 = scmp.eq.s32.totalorder %s25, 0
      %p196 = por %p194, %p195
      %p197 = scmp.ne.s32.totalorder %s186, %s189
      %p198 = scmp.eq.s32.totalorder %s30, 3
      %p199 = por %p197, %p198
      %p200 = scmp.ne.s32.totalorder %s189, %s190
      %p201 = scmp.eq.s32.totalorder %s30, 0
      %p202 = por %p200, %p201
      %p203 = scmp.ne.s32.totalorder %s189, %s190
      %p204 = scmp.eq.s32.totalorder %s31, 3
      %p205 = por %p203, %p204
      %p207 = scmp.ne.s32.totalorder %s190, %s206
      %p208 = scmp.eq.s32.totalorder %s31, 0
      %p209 = por %p207, %p208
      %s210 = ssub.s32 %s25, %s32
      %p211 = scmp.eq.s32.totalorder %s210, 0
      %s213 = sadd.s32 %s212, 1
      %s214 = scalar_select %p211, %s212, %s213
      %p217 = pneg %p211
      %p218 = scmp.eq.s32.totalorder %s25, 3
      %p219 = por %p217, %p218
      %p220 = scmp.ne.s32.totalorder %s212, %s215
      %p221 = scmp.eq.s32.totalorder %s25, 0
      %p222 = por %p220, %p221
      %p223 = scmp.ne.s32.totalorder %s212, %s215
      %p224 = scmp.eq.s32.totalorder %s30, 3
      %p225 = por %p223, %p224
      %p226 = scmp.ne.s32.totalorder %s215, %s216
      %p227 = scmp.eq.s32.totalorder %s30, 0
      %p228 = por %p226, %p227
      %p229 = scmp.ne.s32.totalorder %s215, %s216
      %p230 = scmp.eq.s32.totalorder %s31, 3
      %p231 = por %p229, %p230
      %p233 = scmp.ne.s32.totalorder %s216, %s232
      %p234 = scmp.eq.s32.totalorder %s31, 0
      %p235 = por %p233, %p234
      %s236 = ssub.s32 %s25, %s32
      %p237 = scmp.eq.s32.totalorder %s236, 0
      %s239 = sadd.s32 %s238, 1
      %s240 = scalar_select %p237, %s238, %s239
      %p243 = pneg %p237
      %p244 = scmp.eq.s32.totalorder %s25, 3
      %p245 = por %p243, %p244
      %p246 = scmp.ne.s32.totalorder %s238, %s241
      %p247 = scmp.eq.s32.totalorder %s25, 0
      %p248 = por %p246, %p247
      %p249 = scmp.ne.s32.totalorder %s238, %s241
      %p250 = scmp.eq.s32.totalorder %s30, 3
      %p251 = por %p249, %p250
      %p252 = scmp.ne.s32.totalorder %s241, %s242
      %p253 = scmp.eq.s32.totalorder %s30, 0
      %p254 = por %p252, %p253
      %p255 = scmp.ne.s32.totalorder %s241, %s242
      %p256 = scmp.eq.s32.totalorder %s31, 3
      %p257 = por %p255, %p256
      %p259 = scmp.ne.s32.totalorder %s242, %s258
      %p260 = scmp.eq.s32.totalorder %s31, 0
      %p261 = por %p259, %p260
      %s262 = ssub.s32 %s25, %s32
      %p263 = scmp.eq.s32.totalorder %s262, 0
      %s265 = sadd.s32 %s264, 1
      %s266 = scalar_select %p263, %s264, %s265
      %p269 = pneg %p263
      %p270 = scmp.eq.s32.totalorder %s25, 3
      %p271 = por %p269, %p270
      %p272 = scmp.ne.s32.totalorder %s264, %s267
      %p273 = scmp.eq.s32.totalorder %s25, 0
      %p274 = por %p272, %p273
      %p275 = scmp.ne.s32.totalorder %s264, %s267
      %p276 = scmp.eq.s32.totalorder %s30, 3
      %p277 = por %p275, %p276
      %p278 = scmp.ne.s32.totalorder %s267, %s268
      %p279 = scmp.eq.s32.totalorder %s30, 0
      %p280 = por %p278, %p279
      %p281 = scmp.ne.s32.totalorder %s267, %s268
      %p282 = scmp.eq.s32.totalorder %s31, 3
      %p283 = por %p281, %p282
      %p285 = scmp.ne.s32.totalorder %s268, %s284
      %p286 = scmp.eq.s32.totalorder %s31, 0
      %p287 = por %p285, %p286
      %s288 = ssub.s32 %s25, %s32
      %p289 = scmp.eq.s32.totalorder %s288, 0
      %s291 = sadd.s32 %s290, 1
      %s292 = scalar_select %p289, %s290, %s291
      %p295 = pneg %p289
      %p296 = scmp.eq.s32.totalorder %s25, 3
      %p297 = por %p295, %p296
      %p298 = scmp.ne.s32.totalorder %s290, %s293
      %p299 = scmp.eq.s32.totalorder %s25, 0
      %p300 = por %p298, %p299
      %p301 = scmp.ne.s32.totalorder %s290, %s293
      %p302 = scmp.eq.s32.totalorder %s30, 3
      %p303 = por %p301, %p302
      %p304 = scmp.ne.s32.totalorder %s293, %s294
      %p305 = scmp.eq.s32.totalorder %s30, 0
      %p306 = por %p304, %p305
      %p307 = scmp.ne.s32.totalorder %s293, %s294
      %p308 = scmp.eq.s32.totalorder %s31, 3
      %p309 = por %p307, %p308
      %p311 = scmp.ne.s32.totalorder %s294, %s310
      %p312 = scmp.eq.s32.totalorder %s31, 0
      %p313 = por %p311, %p312
      %s314 = ssub.s32 %s25, %s32
      %p315 = scmp.eq.s32.totalorder %s314, 0
      %s317 = sadd.s32 %s316, 1
      %s318 = scalar_select %p315, %s316, %s317
      %p321 = pneg %p315
      %p322 = scmp.eq.s32.totalorder %s25, 3
      %p323 = por %p321, %p322
      %p324 = scmp.ne.s32.totalorder %s316, %s319
      %p325 = scmp.eq.s32.totalorder %s25, 0
      %p326 = por %p324, %p325
      %p327 = scmp.ne.s32.totalorder %s316, %s319
      %p328 = scmp.eq.s32.totalorder %s30, 3
      %p329 = por %p327, %p328
      %p330 = scmp.ne.s32.totalorder %s319, %s320
      %p331 = scmp.eq.s32.totalorder %s30, 0
      %p332 = por %p330, %p331
      %p333 = scmp.ne.s32.totalorder %s319, %s320
      %p334 = scmp.eq.s32.totalorder %s31, 3
      %p335 = por %p333, %p334
      %p337 = scmp.ne.s32.totalorder %s320, %s336
      %p338 = scmp.eq.s32.totalorder %s31, 0
      %p339 = por %p337, %p338
      %s340 = ssub.s32 %s25, %s32
      %p341 = scmp.eq.s32.totalorder %s340, 0
      %s343 = sadd.s32 %s342, 1
      %s344 = scalar_select %p341, %s342, %s343
      %p347 = pneg %p341
      %p348 = scmp.eq.s32.totalorder %s25, 3
      %p349 = por %p347, %p348
      %p350 = scmp.ne.s32.totalorder %s342, %s345
      %p351 = scmp.eq.s32.totalorder %s25, 0
      %p352 = por %p350, %p351
      %p353 = scmp.ne.s32.totalorder %s342, %s345
      %p354 = scmp.eq.s32.totalorder %s30, 3
      %p355 = por %p353, %p354
      %p356 = scmp.ne.s32.totalorder %s345, %s346
      %p357 = scmp.eq.s32.totalorder %s30, 0
      %p358 = por %p356, %p357
      %p359 = scmp.ne.s32.totalorder %s345, %s346
      %p360 = scmp.eq.s32.totalorder %s31, 3
      %p361 = por %p359, %p360
      %p363 = scmp.ne.s32.totalorder %s346, %s362
      %p364 = scmp.eq.s32.totalorder %s31, 0
      %p365 = por %p363, %p364
      %s366 = ssub.s32 %s25, %s32
      %p367 = scmp.eq.s32.totalorder %s366, 0
      %s369 = sadd.s32 %s368, 1
      %s370 = scalar_select %p367, %s368, %s369
      %p373 = pneg %p367
      %p374 = scmp.eq.s32.totalorder %s25, 3
      %p375 = por %p373, %p374
      %p376 = scmp.ne.s32.totalorder %s368, %s371
      %p377 = scmp.eq.s32.totalorder %s25, 0
      %p378 = por %p376, %p377
      %p379 = scmp.ne.s32.totalorder %s368, %s371
      %p380 = scmp.eq.s32.totalorder %s30, 3
      %p381 = por %p379, %p380
      %p382 = scmp.ne.s32.totalorder %s371, %s372
      %p383 = scmp.eq.s32.totalorder %s30, 0
      %p384 = por %p382, %p383
      %p385 = scmp.ne.s32.totalorder %s371, %s372
      %p386 = scmp.eq.s32.totalorder %s31, 3
      %p387 = por %p385, %p386
      %p389 = scmp.ne.s32.totalorder %s372, %s388
      %p390 = scmp.eq.s32.totalorder %s31, 0
      %p391 = por %p389, %p390
      %p392 = scmp.le.s32.totalorder 1, %s25
      %p393 = scmp.lt.s32.totalorder %s25, 5
      %p394 = pnand %p392, %p393
      %p395 = pneg %p394
      // Predicated region
      $region9: #{tpu_custom_call.1} parent=5 // pred_check
        _
      $region10: #{tpu_custom_call.1} parent=5 // pred_check_branch
        %397 = sbr.rel (%p394) target = $region12
      $region11: #{tpu_custom_call.1} parent=5 // pred_region
        %s398 = ssub.s32 %s25, 1
        // Predicated region
        $region13: #{tpu_custom_call.1} parent=11 // pred_check
          %p399 = pneg %p46
        $region14: #{tpu_custom_call.1} parent=11 // pred_check_branch
          %401 = sbr.rel (%p399) target = $region16
        $region15: #{tpu_custom_call.1} parent=11 // pred_region
          _
        $region16: #{tpu_custom_call.1} parent=11 // pred_fallthru
          _
      $region12: #{tpu_custom_call.1} parent=5 // pred_fallthru
        _
      %p402 = scmp.lt.s32.totalorder %s25, 4
      // Predicated region
      $region17: #{tpu_custom_call.1} parent=5 // pred_check
        %p403 = pneg %p402
      $region18: #{tpu_custom_call.1} parent=5 // pred_check_branch
        %405 = sbr.rel (%p403) target = $region20
      $region19: #{tpu_custom_call.1} parent=5 // pred_region
        // Predicated region
        $region21: #{tpu_custom_call.1} parent=19 // pred_check
          %p406 = pneg %p66
        $region22: #{tpu_custom_call.1} parent=19 // pred_check_branch
          %408 = sbr.rel (%p406) target = $region24
        $region23: #{tpu_custom_call.1} parent=19 // pred_region
          %p409 = scmp.lt.s32.totalorder %s25, 3
          %s410 = scalar_select %p409, %s25, 3
          %s411 = smul.addr %s410, 32
          %s412 = smul.addr %s411, 4
          %s413 = scalar_lea.vmem %s1, %s412
        $region24: #{tpu_custom_call.1} parent=19 // pred_fallthru
          _
        // Predicated region
        $region25: #{tpu_custom_call.1} parent=19 // pred_check
          %p414 = pneg %p92
        $region26: #{tpu_custom_call.1} parent=19 // pred_check_branch
          %416 = sbr.rel (%p414) target = $region28
        $region27: #{tpu_custom_call.1} parent=19 // pred_region
          %p417 = scmp.lt.s32.totalorder %s25, 3
          %s418 = scalar_select %p417, %s25, 3
          %s419 = smul.addr %s418, 2
          %s420 = scalar_lea.vmem %s2, %s419
        $region28: #{tpu_custom_call.1} parent=19 // pred_fallthru
          _
        // Predicated region
        $region29: #{tpu_custom_call.1} parent=19 // pred_check
          %p421 = pneg %p118
        $region30: #{tpu_custom_call.1} parent=19 // pred_check_branch
          %423 = sbr.rel (%p421) target = $region32
        $region31: #{tpu_custom_call.1} parent=19 // pred_region
          %s424 = sand.u32 %s108, 1
          %s425 = scalar_lea.sflag [#allocation3], %s424
          %s426 = sand.u32 %s108, 1
          %s427 = smul.addr %s426, 256
          %s428 = scalar_lea.vmem [#allocation2], %s427
          %s430 = ssub.s32 4096, 4096
          %431 = vsyncadd %s425, %s430
          %s432 = smul.addr %s25, 64
          %s433 = smul.addr %s432, 64
          %s434 = scalar_lea.hbm %s3, %s433
          %s435 = sshll.u32 %s428, 4
          %s436 = int_to_ptr.vmem [resolvable:$true] %s435
          %441 = dma.hbm_to_vmem [thread:$0]  %s434, 4096, %s436, %s425, 128, 128, 8
        $region32: #{tpu_custom_call.1} parent=19 // pred_fallthru
          _
        // Predicated region
        $region33: #{tpu_custom_call.1} parent=19 // pred_check
          %p442 = pneg %p144
        $region34: #{tpu_custom_call.1} parent=19 // pred_check_branch
          %444 = sbr.rel (%p442) target = $region36
        $region35: #{tpu_custom_call.1} parent=19 // pred_region
          %p445 = scmp.lt.s32.totalorder %s25, 3
          %s446 = scalar_select %p445, %s25, 3
          %s447 = smul.addr %s446, 2
          %s448 = scalar_lea.vmem %s4, %s447
        $region36: #{tpu_custom_call.1} parent=19 // pred_fallthru
          _
        // Predicated region
        $region37: #{tpu_custom_call.1} parent=19 // pred_check
          %p449 = pneg %p170
        $region38: #{tpu_custom_call.1} parent=19 // pred_check_branch
          %451 = sbr.rel (%p449) target = $region40
        $region39: #{tpu_custom_call.1} parent=19 // pred_region
          %s452 = sand.u32 %s160, 1
          %s453 = scalar_lea.sflag [#allocation5], %s452
          %s454 = sand.u32 %s160, 1
          %s455 = smul.addr %s454, 128
          %s456 = scalar_lea.vmem [#allocation4], %s455
          %s458 = ssub.s32 2048, 2048
          %459 = vsyncadd %s453, %s458
          %s460 = smul.addr %s25, 32
          %s461 = smul.addr %s460, 64
          %s462 = scalar_lea.hbm %s5, %s461
          %s463 = sshll.u32 %s456, 4
          %s464 = int_to_ptr.vmem [resolvable:$true] %s463
          %469 = dma.hbm_to_vmem [thread:$0]  %s462, 2048, %s464, %s453, 64, 64, 4
        $region40: #{tpu_custom_call.1} parent=19 // pred_fallthru
          _
        // Predicated region
        $region41: #{tpu_custom_call.1} parent=19 // pred_check
          %p470 = pneg %p196
        $region42: #{tpu_custom_call.1} parent=19 // pred_check_branch
          %472 = sbr.rel (%p470) target = $region44
        $region43: #{tpu_custom_call.1} parent=19 // pred_region
          %p473 = scmp.lt.s32.totalorder %s25, 3
          %s474 = scalar_select %p473, %s25, 3
          %s475 = scalar_lea.vmem %s6, %s474
        $region44: #{tpu_custom_call.1} parent=19 // pred_fallthru
          _
        // Predicated region
        $region45: #{tpu_custom_call.1} parent=19 // pred_check
          %p476 = pneg %p222
        $region46: #{tpu_custom_call.1} parent=19 // pred_check_branch
          %478 = sbr.rel (%p476) target = $region48
        $region47: #{tpu_custom_call.1} parent=19 // pred_region
          %p479 = scmp.lt.s32.totalorder %s25, 3
          %s480 = scalar_select %p479, %s25, 3
          %s481 = smul.addr %s480, 16
          %s482 = smul.addr %s481, 4
          %s483 = scalar_lea.vmem %s7, %s482
        $region48: #{tpu_custom_call.1} parent=19 // pred_fallthru
          _
        // Predicated region
        $region49: #{tpu_custom_call.1} parent=19 // pred_check
          %p484 = pneg %p248
        $region50: #{tpu_custom_call.1} parent=19 // pred_check_branch
          %486 = sbr.rel (%p484) target = $region52
        $region51: #{tpu_custom_call.1} parent=19 // pred_region
          %p487 = scmp.lt.s32.totalorder %s25, 3
          %s488 = scalar_select %p487, %s25, 3
          %s489 = scalar_lea.vmem %s8, %s488
        $region52: #{tpu_custom_call.1} parent=19 // pred_fallthru
          _
        // Predicated region
        $region53: #{tpu_custom_call.1} parent=19 // pred_check
          %p490 = pneg %p274
        $region54: #{tpu_custom_call.1} parent=19 // pred_check_branch
          %492 = sbr.rel (%p490) target = $region56
        $region55: #{tpu_custom_call.1} parent=19 // pred_region
          %p493 = scmp.lt.s32.totalorder %s25, 3
          %s494 = scalar_select %p493, %s25, 3
          %s495 = smul.addr %s494, 12
          %s496 = smul.addr %s495, 4
          %s497 = scalar_lea.vmem %s9, %s496
        $region56: #{tpu_custom_call.1} parent=19 // pred_fallthru
          _
        // Predicated region
        $region57: #{tpu_custom_call.1} parent=19 // pred_check
          %p498 = pneg %p300
        $region58: #{tpu_custom_call.1} parent=19 // pred_check_branch
          %500 = sbr.rel (%p498) target = $region60
        $region59: #{tpu_custom_call.1} parent=19 // pred_region
          %p501 = scmp.lt.s32.totalorder %s25, 3
          %s502 = scalar_select %p501, %s25, 3
          %s503 = scalar_lea.vmem %s10, %s502
        $region60: #{tpu_custom_call.1} parent=19 // pred_fallthru
          _
        // Predicated region
        $region61: #{tpu_custom_call.1} parent=19 // pred_check
          %p504 = pneg %p326
        $region62: #{tpu_custom_call.1} parent=19 // pred_check_branch
          %506 = sbr.rel (%p504) target = $region64
        $region63: #{tpu_custom_call.1} parent=19 // pred_region
          %p507 = scmp.lt.s32.totalorder %s25, 3
          %s508 = scalar_select %p507, %s25, 3
          %s509 = scalar_lea.vmem %s11, %s508
        $region64: #{tpu_custom_call.1} parent=19 // pred_fallthru
          _
        // Predicated region
        $region65: #{tpu_custom_call.1} parent=19 // pred_check
          %p510 = pneg %p352
        $region66: #{tpu_custom_call.1} parent=19 // pred_check_branch
          %512 = sbr.rel (%p510) target = $region68
        $region67: #{tpu_custom_call.1} parent=19 // pred_region
          %p513 = scmp.lt.s32.totalorder %s25, 3
          %s514 = scalar_select %p513, %s25, 3
          %s515 = scalar_lea.vmem %s12, %s514
        $region68: #{tpu_custom_call.1} parent=19 // pred_fallthru
          _
      $region20: #{tpu_custom_call.1} parent=5 // pred_fallthru
        _
      %p516 = scmp.le.s32.totalorder 1, %s25
      %p517 = scmp.lt.s32.totalorder %s25, 5
      %p518 = pnand %p516, %p517
      %p519 = pneg %p518
      // Predicated region
      $region69: #{tpu_custom_call.1} parent=5 // pred_check
        _
      $region70: #{tpu_custom_call.1} parent=5 // pred_check_branch
        %521 = sbr.rel (%p518) target = $region72
      $region71: #{tpu_custom_call.1} parent=5 // pred_region
        %s522 = ssub.s32 %s25, 1
        %s523 = sand.u32 %s111, 1
        %s524 = scalar_lea.sflag [#allocation3], %s523
        %s525 = sand.u32 %s111, 1
        %s526 = smul.addr %s525, 256
        %s527 = scalar_lea.vmem [#allocation2], %s526
        // Predicated region
        $region73: #{tpu_custom_call.1} parent=71 // pred_check
          %p528 = pneg %p124
        $region74: #{tpu_custom_call.1} parent=71 // pred_check_branch
          %530 = sbr.rel (%p528) target = $region76
        $region75: #{tpu_custom_call.1} parent=71 // pred_region
          %531 = dma.done %s524, 4096
        $region76: #{tpu_custom_call.1} parent=71 // pred_fallthru
          _
        %s532 = sand.u32 %s163, 1
        %s533 = scalar_lea.sflag [#allocation5], %s532
        %s534 = sand.u32 %s163, 1
        %s535 = smul.addr %s534, 128
        %s536 = scalar_lea.vmem [#allocation4], %s535
        // Predicated region
        $region77: #{tpu_custom_call.1} parent=71 // pred_check
          %p537 = pneg %p176
        $region78: #{tpu_custom_call.1} parent=71 // pred_check_branch
          %539 = sbr.rel (%p537) target = $region80
        $region79: #{tpu_custom_call.1} parent=71 // pred_region
          %540 = dma.done %s533, 2048
        $region80: #{tpu_custom_call.1} parent=71 // pred_fallthru
          _
        %p541 = pneg %p46
        %p542 = pneg %p43
        %p543 = scmp.lt.s32.totalorder %s30, 3
        %s544 = scalar_select %p543, %s30, 3
        %s545 = smul.addr %s544, 32
        %s546 = smul.addr %s545, 4
        %s547 = scalar_lea.vmem %s1, %s546
        %p548 = pneg %p72
        %p549 = pneg %p69
        %p550 = scmp.lt.s32.totalorder %s30, 3
        %s551 = scalar_select %p550, %s30, 3
        %s552 = smul.addr %s551, 2
        %s553 = scalar_lea.vmem %s2, %s552
        %p554 = pneg %p98
        %p555 = pneg %p95
        %s556 = sand.u32 %s111, 1
        %s557 = scalar_lea.sflag [#allocation3], %s556
        %s558 = sand.u32 %s111, 1
        %s559 = smul.addr %s558, 256
        %s560 = scalar_lea.vmem [#allocation2], %s559
        %p561 = pneg %p124
        %p562 = pneg %p121
        %p563 = scmp.lt.s32.totalorder %s30, 3
        %s564 = scalar_select %p563, %s30, 3
        %s565 = smul.addr %s564, 2
        %s566 = scalar_lea.vmem %s4, %s565
        %p567 = pneg %p150
        %p568 = pneg %p147
        %s569 = sand.u32 %s163, 1
        %s570 = scalar_lea.sflag [#allocation5], %s569
        %s571 = sand.u32 %s163, 1
        %s572 = smul.addr %s571, 128
        %s573 = scalar_lea.vmem [#allocation4], %s572
        %p574 = pneg %p176
        %p575 = pneg %p173
        %p576 = scmp.lt.s32.totalorder %s30, 3
        %s577 = scalar_select %p576, %s30, 3
        %s578 = scalar_lea.vmem %s6, %s577
        %p579 = pneg %p202
        %p580 = pneg %p199
        %p581 = scmp.lt.s32.totalorder %s30, 3
        %s582 = scalar_select %p581, %s30, 3
        %s583 = smul.addr %s582, 16
        %s584 = smul.addr %s583, 4
        %s585 = scalar_lea.vmem %s7, %s584
        %p586 = pneg %p228
        %p587 = pneg %p225
        %p588 = scmp.lt.s32.totalorder %s30, 3
        %s589 = scalar_select %p588, %s30, 3
        %s590 = scalar_lea.vmem %s8, %s589
        %p591 = pneg %p254
        %p592 = pneg %p251
        %p593 = scmp.lt.s32.totalorder %s30, 3
        %s594 = scalar_select %p593, %s30, 3
        %s595 = smul.addr %s594, 12
        %s596 = smul.addr %s595, 4
        %s597 = scalar_lea.vmem %s9, %s596
        %p598 = pneg %p280
        %p599 = pneg %p277
        %p600 = scmp.lt.s32.totalorder %s30, 3
        %s601 = scalar_select %p600, %s30, 3
        %s602 = scalar_lea.vmem %s10, %s601
        %p603 = pneg %p306
        %p604 = pneg %p303
        %p605 = scmp.lt.s32.totalorder %s30, 3
        %s606 = scalar_select %p605, %s30, 3
        %s607 = scalar_lea.vmem %s11, %s606
        %p608 = pneg %p332
        %p609 = pneg %p329
        %p610 = scmp.lt.s32.totalorder %s30, 3
        %s611 = scalar_select %p610, %s30, 3
        %s612 = scalar_lea.vmem %s12, %s611
        %p613 = pneg %p358
        %p614 = pneg %p355
        %p615 = pneg %p384
        %p616 = pneg %p381
        %p617 = scmp.lt.s32.totalorder %s30, 3
        %s618 = scalar_select %p617, %s30, 3
        %s619 = smul.addr %s618, 2
        %s620 = scalar_lea.vmem %s13, %s619
        %p621 = scmp.lt.s32.totalorder %s30, 3
        %s622 = scalar_select %p621, %s30, 3
        %s623 = smul.addr %s622, 32
        %s624 = smul.addr %s623, 4
        %s625 = scalar_lea.vmem %s1, %s624
        %p626 = scmp.lt.s32.totalorder %s30, 3
        %s627 = scalar_select %p626, %s30, 3
        %s628 = smul.addr %s627, 2
        %s629 = scalar_lea.vmem %s2, %s628
        %p630 = scmp.lt.s32.totalorder %s30, 3
        %s631 = scalar_select %p630, %s30, 3
        %s632 = smul.addr %s631, 2
        %s633 = scalar_lea.vmem %s4, %s632
        %p634 = scmp.lt.s32.totalorder %s30, 3
        %s635 = scalar_select %p634, %s30, 3
        %s636 = scalar_lea.vmem %s6, %s635
        %p637 = scmp.lt.s32.totalorder %s30, 3
        %s638 = scalar_select %p637, %s30, 3
        %s639 = smul.addr %s638, 16
        %s640 = smul.addr %s639, 4
        %s641 = scalar_lea.vmem %s7, %s640
        %p642 = scmp.lt.s32.totalorder %s30, 3
        %s643 = scalar_select %p642, %s30, 3
        %s644 = scalar_lea.vmem %s8, %s643
        %p645 = scmp.lt.s32.totalorder %s30, 3
        %s646 = scalar_select %p645, %s30, 3
        %s647 = smul.addr %s646, 12
        %s648 = smul.addr %s647, 4
        %s649 = scalar_lea.vmem %s9, %s648
        %p650 = scmp.lt.s32.totalorder %s30, 3
        %s651 = scalar_select %p650, %s30, 3
        %s652 = scalar_lea.vmem %s10, %s651
        %p653 = scmp.lt.s32.totalorder %s30, 3
        %s654 = scalar_select %p653, %s30, 3
        %s655 = scalar_lea.vmem %s11, %s654
        %p656 = scmp.lt.s32.totalorder %s30, 3
        %s657 = scalar_select %p656, %s30, 3
        %s658 = scalar_lea.vmem %s12, %s657
        %p659 = scmp.lt.s32.totalorder %s30, 3
        %s660 = scalar_select %p659, %s30, 3
        %s661 = smul.addr %s660, 2
        %s662 = scalar_lea.vmem %s13, %s661
        %v664 = vld [vmem:[%s0] sm:$0x3]
        %v665 = vld [vmem:[%s625] sm:$0xff]
        %v666 = vld [vmem:[%s625 + $0x8] sm:$0xff]
        %v667 = vld [vmem:[%s625 + $0x10] sm:$0xff]
        %v668 = vld [vmem:[%s625 + $0x18] sm:$0xff]
        %v669 = vld [vmem:[%s625 + $0x20] sm:$0xff]
        %v670 = vld [vmem:[%s625 + $0x28] sm:$0xff]
        %v671 = vld [vmem:[%s625 + $0x30] sm:$0xff]
        %v672 = vld [vmem:[%s625 + $0x38] sm:$0xff]
        %v673 = vld [vmem:[%s625 + $0x40] sm:$0xff]
        %v674 = vld [vmem:[%s625 + $0x48] sm:$0xff]
        %v675 = vld [vmem:[%s625 + $0x50] sm:$0xff]
        %v676 = vld [vmem:[%s625 + $0x58] sm:$0xff]
        %v677 = vld [vmem:[%s625 + $0x60] sm:$0xff]
        %v678 = vld [vmem:[%s625 + $0x68] sm:$0xff]
        %v679 = vld [vmem:[%s625 + $0x70] sm:$0xff]
        %v680 = vld [vmem:[%s625 + $0x78] sm:$0xff]
        %v681 = vld [vmem:[%s629] sm:$0x3]
        %v682 = vpack.c.bf16 %v664, %v664
        %v684 = vlaneseq
        %v685 = vshrl.u32 %v684, 7
        %v686 = vsub.s32 0, %v685
        %v687 = vrot.slane %v681, %v686
        %v688 = vlaneseq
        %v689 = vshrl.u32 %v688, 7
        %v690 = vsub.s32 1, %v689
        %v691 = vrot.slane %v681, %v690
        %v710 = vunpack.c.l.b16 %v665
        %v711 = vunpack.c.h.b16 %v665
        %v712 = vunpack.c.l.b16 %v666
        %v713 = vunpack.c.h.b16 %v666
        %v714 = vunpack.c.l.b16 %v667
        %v715 = vunpack.c.h.b16 %v667
        %v716 = vunpack.c.l.b16 %v668
        %v717 = vunpack.c.h.b16 %v668
        %v718 = vunpack.c.l.b16 %v669
        %v719 = vunpack.c.h.b16 %v669
        %v720 = vunpack.c.l.b16 %v670
        %v721 = vunpack.c.h.b16 %v670
        %v722 = vunpack.c.l.b16 %v671
        %v723 = vunpack.c.h.b16 %v671
        %v724 = vunpack.c.l.b16 %v672
        %v725 = vunpack.c.h.b16 %v672
        %v726 = vunpack.c.l.b16 %v673
        %v727 = vunpack.c.h.b16 %v673
        %v728 = vunpack.c.l.b16 %v674
        %v729 = vunpack.c.h.b16 %v674
        %v730 = vunpack.c.l.b16 %v675
        %v731 = vunpack.c.h.b16 %v675
        %v732 = vunpack.c.l.b16 %v676
        %v733 = vunpack.c.h.b16 %v676
        %v734 = vunpack.c.l.b16 %v677
        %v735 = vunpack.c.h.b16 %v677
        %v736 = vunpack.c.l.b16 %v678
        %v737 = vunpack.c.h.b16 %v678
        %v738 = vunpack.c.l.b16 %v679
        %v739 = vunpack.c.h.b16 %v679
        %v740 = vunpack.c.l.b16 %v680
        %v741 = vunpack.c.h.b16 %v680
        %v742 = vpack.c.b16 %v712, %v710
        %v743 = vpack.c.b16 %v713, %v711
        %v744 = vpack.c.b16 %v716, %v714
        %v745 = vpack.c.b16 %v717, %v715
        %v746 = vpack.c.b16 %v720, %v718
        %v747 = vpack.c.b16 %v721, %v719
        %v748 = vpack.c.b16 %v724, %v722
        %v749 = vpack.c.b16 %v725, %v723
        %v750 = vpack.c.b16 %v728, %v726
        %v751 = vpack.c.b16 %v729, %v727
        %v752 = vpack.c.b16 %v732, %v730
        %v753 = vpack.c.b16 %v733, %v731
        %v754 = vpack.c.b16 %v736, %v734
        %v755 = vpack.c.b16 %v737, %v735
        %v756 = vpack.c.b16 %v740, %v738
        %v757 = vpack.c.b16 %v741, %v739
        %774 = vmatprep.subr.bf16.mxu0 %v757
        %775 = vmatpush1.bf16.msra.mxu0 %v756
        %776 = vmatprep.subr.bf16.mxu0 %v755
        %777 = vmatpush1.bf16.msra.mxu0 %v754
        %778 = vmatprep.subr.bf16.mxu0 %v753
        %779 = vmatpush1.bf16.msra.mxu0 %v752
        %780 = vmatprep.subr.bf16.mxu0 %v751
        %781 = vmatpush1.bf16.msra.mxu0 %v750
        %782 = vmatprep.subr.bf16.mxu0 %v749
        %783 = vmatpush1.bf16.msra.mxu0 %v748
        %784 = vmatprep.subr.bf16.mxu0 %v747
        %785 = vmatpush1.bf16.msra.mxu0 %v746
        %786 = vmatprep.subr.bf16.mxu0 %v745
        %787 = vmatpush1.bf16.msra.mxu0 %v744
        %788 = vmatprep.subr.bf16.mxu0 %v743
        %789 = vmatpush1.bf16.msra.mxu0 %v742
        %790 = vmatprep.subr.bf16.mxu0 0
        %791 = vmatpush2.bf16.msra.mxu0 0
        %792 = vmatprep.subr.bf16.mxu0 0
        %793 = vmatpush2.bf16.msra.mxu0 0
        %794 = vmatprep.subr.bf16.mxu0 0
        %795 = vmatpush2.bf16.msra.mxu0 0
        %796 = vmatprep.subr.bf16.mxu0 0
        %797 = vmatpush2.bf16.msra.mxu0 0
        %798 = vmatprep.subr.bf16.mxu0 0
        %799 = vmatpush2.bf16.msra.mxu0 0
        %800 = vmatprep.subr.bf16.mxu0 0
        %801 = vmatpush2.bf16.msra.mxu0 0
        %802 = vmatprep.subr.bf16.mxu0 0
        %803 = vmatpush2.bf16.msra.mxu0 0
        %804 = vmatprep.subr.bf16.mxu0 0
        %805 = vmatpush2.bf16.msra.mxu0 0
        %806 = vmatprep.mubr.bf16.mxu0 0
        %807 = vmatmul.mubr.bf16.gmra.mxu0 %v682
        %v808 = vpop.f32.mrf.mxu0
        %v809 = vadd.f32 %v687, %v808
        %v810 = vpop.f32.mrf.mxu0
        %v811 = vadd.f32 %v691, %v810
        %v812 = vpop.f32.mrf.mxu0
        %v813 = vpop.f32.mrf.mxu0
        %814 = vdwg.mxu0
        %v815 = vmax.f32 %v809, 0.0
        %v816 = vmax.f32 %v811, 0.0
        %v817 = vld [vmem:[%s527] sm:$0xff]
        %v818 = vld [vmem:[%s527 + $0x8] sm:$0xff]
        %v819 = vld [vmem:[%s527 + $0x10] sm:$0xff]
        %v820 = vld [vmem:[%s527 + $0x18] sm:$0xff]
        %v821 = vld [vmem:[%s527 + $0x20] sm:$0xff]
        %v822 = vld [vmem:[%s527 + $0x28] sm:$0xff]
        %v823 = vld [vmem:[%s527 + $0x30] sm:$0xff]
        %v824 = vld [vmem:[%s527 + $0x38] sm:$0xff]
        %v825 = vld [vmem:[%s527 + $0x40] sm:$0xff]
        %v826 = vld [vmem:[%s527 + $0x48] sm:$0xff]
        %v827 = vld [vmem:[%s527 + $0x50] sm:$0xff]
        %v828 = vld [vmem:[%s527 + $0x58] sm:$0xff]
        %v829 = vld [vmem:[%s527 + $0x60] sm:$0xff]
        %v830 = vld [vmem:[%s527 + $0x68] sm:$0xff]
        %v831 = vld [vmem:[%s527 + $0x70] sm:$0xff]
        %v832 = vld [vmem:[%s527 + $0x78] sm:$0xff]
        %v833 = vld [vmem:[%s527 + $0x80] sm:$0xff]
        %v834 = vld [vmem:[%s527 + $0x88] sm:$0xff]
        %v835 = vld [vmem:[%s527 + $0x90] sm:$0xff]
        %v836 = vld [vmem:[%s527 + $0x98] sm:$0xff]
        %v837 = vld [vmem:[%s527 + $0xa0] sm:$0xff]
        %v838 = vld [vmem:[%s527 + $0xa8] sm:$0xff]
        %v839 = vld [vmem:[%s527 + $0xb0] sm:$0xff]
        %v840 = vld [vmem:[%s527 + $0xb8] sm:$0xff]
        %v841 = vld [vmem:[%s527 + $0xc0] sm:$0xff]
        %v842 = vld [vmem:[%s527 + $0xc8] sm:$0xff]
        %v843 = vld [vmem:[%s527 + $0xd0] sm:$0xff]
        %v844 = vld [vmem:[%s527 + $0xd8] sm:$0xff]
        %v845 = vld [vmem:[%s527 + $0xe0] sm:$0xff]
        %v846 = vld [vmem:[%s527 + $0xe8] sm:$0xff]
        %v847 = vld [vmem:[%s527 + $0xf0] sm:$0xff]
        %v848 = vld [vmem:[%s527 + $0xf8] sm:$0xff]
        %v849 = vld [vmem:[%s633] sm:$0x3]
        %v850 = vpack.c.bf16 %v815, %v815
        %v851 = vpack.c.bf16 %v816, %v816
        %v853 = vlaneseq
        %v854 = vshrl.u32 %v853, 7
        %v855 = vsub.s32 0, %v854
        %v856 = vrot.slane %v849, %v855
        %v857 = vlaneseq
        %v858 = vshrl.u32 %v857, 7
        %v859 = vsub.s32 1, %v858
        %v860 = vrot.slane %v849, %v859
        %v895 = vunpack.c.l.b16 %v817
        %v896 = vunpack.c.h.b16 %v817
        %v897 = vunpack.c.l.b16 %v818
        %v898 = vunpack.c.h.b16 %v818
        %v899 = vunpack.c.l.b16 %v819
        %v900 = vunpack.c.h.b16 %v819
        %v901 = vunpack.c.l.b16 %v820
        %v902 = vunpack.c.h.b16 %v820
        %v903 = vunpack.c.l.b16 %v821
        %v904 = vunpack.c.h.b16 %v821
        %v905 = vunpack.c.l.b16 %v822
        %v906 = vunpack.c.h.b16 %v822
        %v907 = vunpack.c.l.b16 %v823
        %v908 = vunpack.c.h.b16 %v823
        %v909 = vunpack.c.l.b16 %v824
        %v910 = vunpack.c.h.b16 %v824
        %v911 = vunpack.c.l.b16 %v825
        %v912 = vunpack.c.h.b16 %v825
        %v913 = vunpack.c.l.b16 %v826
        %v914 = vunpack.c.h.b16 %v826
        %v915 = vunpack.c.l.b16 %v827
        %v916 = vunpack.c.h.b16 %v827
        %v917 = vunpack.c.l.b16 %v828
        %v918 = vunpack.c.h.b16 %v828
        %v919 = vunpack.c.l.b16 %v829
        %v920 = vunpack.c.h.b16 %v829
        %v921 = vunpack.c.l.b16 %v830
        %v922 = vunpack.c.h.b16 %v830
        %v923 = vunpack.c.l.b16 %v831
        %v924 = vunpack.c.h.b16 %v831
        %v925 = vunpack.c.l.b16 %v832
        %v926 = vunpack.c.h.b16 %v832
        %v927 = vunpack.c.l.b16 %v833
        %v928 = vunpack.c.h.b16 %v833
        %v929 = vunpack.c.l.b16 %v834
        %v930 = vunpack.c.h.b16 %v834
        %v931 = vunpack.c.l.b16 %v835
        %v932 = vunpack.c.h.b16 %v835
        %v933 = vunpack.c.l.b16 %v836
        %v934 = vunpack.c.h.b16 %v836
        %v935 = vunpack.c.l.b16 %v837
        %v936 = vunpack.c.h.b16 %v837
        %v937 = vunpack.c.l.b16 %v838
        %v938 = vunpack.c.h.b16 %v838
        %v939 = vunpack.c.l.b16 %v839
        %v940 = vunpack.c.h.b16 %v839
        %v941 = vunpack.c.l.b16 %v840
        %v942 = vunpack.c.h.b16 %v840
        %v943 = vunpack.c.l.b16 %v841
        %v944 = vunpack.c.h.b16 %v841
        %v945 = vunpack.c.l.b16 %v842
        %v946 = vunpack.c.h.b16 %v842
        %v947 = vunpack.c.l.b16 %v843
        %v948 = vunpack.c.h.b16 %v843
        %v949 = vunpack.c.l.b16 %v844
        %v950 = vunpack.c.h.b16 %v844
        %v951 = vunpack.c.l.b16 %v845
        %v952 = vunpack.c.h.b16 %v845
        %v953 = vunpack.c.l.b16 %v846
        %v954 = vunpack.c.h.b16 %v846
        %v955 = vunpack.c.l.b16 %v847
        %v956 = vunpack.c.h.b16 %v847
        %v957 = vunpack.c.l.b16 %v848
        %v958 = vunpack.c.h.b16 %v848
        %v959 = vpack.c.b16 %v897, %v895
        %v960 = vpack.c.b16 %v898, %v896
        %v961 = vpack.c.b16 %v901, %v899
        %v962 = vpack.c.b16 %v902, %v900
        %v963 = vpack.c.b16 %v905, %v903
        %v964 = vpack.c.b16 %v906, %v904
        %v965 = vpack.c.b16 %v909, %v907
        %v966 = vpack.c.b16 %v910, %v908
        %v967 = vpack.c.b16 %v913, %v911
        %v968 = vpack.c.b16 %v914, %v912
        %v969 = vpack.c.b16 %v917, %v915
        %v970 = vpack.c.b16 %v918, %v916
        %v971 = vpack.c.b16 %v921, %v919
        %v972 = vpack.c.b16 %v922, %v920
        %v973 = vpack.c.b16 %v925, %v923
        %v974 = vpack.c.b16 %v926, %v924
        %v975 = vpack.c.b16 %v929, %v927
        %v976 = vpack.c.b16 %v930, %v928
        %v977 = vpack.c.b16 %v933, %v931
        %v978 = vpack.c.b16 %v934, %v932
        %v979 = vpack.c.b16 %v937, %v935
        %v980 = vpack.c.b16 %v938, %v936
        %v981 = vpack.c.b16 %v941, %v939
        %v982 = vpack.c.b16 %v942, %v940
        %v983 = vpack.c.b16 %v945, %v943
        %v984 = vpack.c.b16 %v946, %v944
        %v985 = vpack.c.b16 %v949, %v947
        %v986 = vpack.c.b16 %v950, %v948
        %v987 = vpack.c.b16 %v953, %v951
        %v988 = vpack.c.b16 %v954, %v952
        %v989 = vpack.c.b16 %v957, %v955
        %v990 = vpack.c.b16 %v958, %v956
        %1023 = vmatprep.subr.bf16.mxu0 %v974
        %1024 = vmatpush1.bf16.msra.mxu0 %v973
        %1025 = vmatprep.subr.bf16.mxu0 %v972
        %1026 = vmatpush1.bf16.msra.mxu0 %v971
        %1027 = vmatprep.subr.bf16.mxu0 %v970
        %1028 = vmatpush1.bf16.msra.mxu0 %v969
        %1029 = vmatprep.subr.bf16.mxu0 %v968
        %1030 = vmatpush1.bf16.msra.mxu0 %v967
        %1031 = vmatprep.subr.bf16.mxu0 %v966
        %1032 = vmatpush1.bf16.msra.mxu0 %v965
        %1033 = vmatprep.subr.bf16.mxu0 %v964
        %1034 = vmatpush1.bf16.msra.mxu0 %v963
        %1035 = vmatprep.subr.bf16.mxu0 %v962
        %1036 = vmatpush1.bf16.msra.mxu0 %v961
        %1037 = vmatprep.subr.bf16.mxu0 %v960
        %1038 = vmatpush1.bf16.msra.mxu0 %v959
        %1039 = vmatprep.subr.bf16.mxu0 %v990
        %1040 = vmatpush2.bf16.msra.mxu0 %v989
        %1041 = vmatprep.subr.bf16.mxu0 %v988
        %1042 = vmatpush2.bf16.msra.mxu0 %v987
        %1043 = vmatprep.subr.bf16.mxu0 %v986
        %1044 = vmatpush2.bf16.msra.mxu0 %v985
        %1045 = vmatprep.subr.bf16.mxu0 %v984
        %1046 = vmatpush2.bf16.msra.mxu0 %v983
        %1047 = vmatprep.subr.bf16.mxu0 %v982
        %1048 = vmatpush2.bf16.msra.mxu0 %v981
        %1049 = vmatprep.subr.bf16.mxu0 %v980
        %1050 = vmatpush2.bf16.msra.mxu0 %v979
        %1051 = vmatprep.subr.bf16.mxu0 %v978
        %1052 = vmatpush2.bf16.msra.mxu0 %v977
        %1053 = vmatprep.subr.bf16.mxu0 %v976
        %1054 = vmatpush2.bf16.msra.mxu0 %v975
        %1055 = vmatprep.mubr.bf16.mxu0 %v851
        %1056 = vmatmul.mubr.bf16.gmra.mxu0 %v850
        %v1057 = vpop.f32.mrf.mxu0
        %v1058 = vadd.f32 %v856, %v1057
        %v1059 = vpop.f32.mrf.mxu0
        %v1060 = vadd.f32 %v860, %v1059
        %v1061 = vpop.f32.mrf.mxu0
        %v1062 = vpop.f32.mrf.mxu0
        %1063 = vdwg.mxu0
        %v1064 = vmax.f32 %v1058, 0.0
        %v1065 = vmax.f32 %v1060, 0.0
        %v1066 = vld [vmem:[%s536] sm:$0xf]
        %v1067 = vld [vmem:[%s536 + $0x4] sm:$0xf]
        %v1068 = vld [vmem:[%s536 + $0x8] sm:$0xf]
        %v1069 = vld [vmem:[%s536 + $0xc] sm:$0xf]
        %v1070 = vld [vmem:[%s536 + $0x10] sm:$0xf]
        %v1071 = vld [vmem:[%s536 + $0x14] sm:$0xf]
        %v1072 = vld [vmem:[%s536 + $0x18] sm:$0xf]
        %v1073 = vld [vmem:[%s536 + $0x1c] sm:$0xf]
        %v1074 = vld [vmem:[%s536 + $0x20] sm:$0xf]
        %v1075 = vld [vmem:[%s536 + $0x24] sm:$0xf]
        %v1076 = vld [vmem:[%s536 + $0x28] sm:$0xf]
        %v1077 = vld [vmem:[%s536 + $0x2c] sm:$0xf]
        %v1078 = vld [vmem:[%s536 + $0x30] sm:$0xf]
        %v1079 = vld [vmem:[%s536 + $0x34] sm:$0xf]
        %v1080 = vld [vmem:[%s536 + $0x38] sm:$0xf]
        %v1081 = vld [vmem:[%s536 + $0x3c] sm:$0xf]
        %v1082 = vld [vmem:[%s536 + $0x40] sm:$0xf]
        %v1083 = vld [vmem:[%s536 + $0x44] sm:$0xf]
        %v1084 = vld [vmem:[%s536 + $0x48] sm:$0xf]
        %v1085 = vld [vmem:[%s536 + $0x4c] sm:$0xf]
        %v1086 = vld [vmem:[%s536 + $0x50] sm:$0xf]
        %v1087 = vld [vmem:[%s536 + $0x54] sm:$0xf]
        %v1088 = vld [vmem:[%s536 + $0x58] sm:$0xf]
        %v1089 = vld [vmem:[%s536 + $0x5c] sm:$0xf]
        %v1090 = vld [vmem:[%s536 + $0x60] sm:$0xf]
        %v1091 = vld [vmem:[%s536 + $0x64] sm:$0xf]
        %v1092 = vld [vmem:[%s536 + $0x68] sm:$0xf]
        %v1093 = vld [vmem:[%s536 + $0x6c] sm:$0xf]
        %v1094 = vld [vmem:[%s536 + $0x70] sm:$0xf]
        %v1095 = vld [vmem:[%s536 + $0x74] sm:$0xf]
        %v1096 = vld [vmem:[%s536 + $0x78] sm:$0xf]
        %v1097 = vld [vmem:[%s536 + $0x7c] sm:$0xf]
        %v1098 = vld [vmem:[%s636] sm:$0x1]
        %v1099 = vpack.c.bf16 %v1064, %v1064
        %v1100 = vpack.c.bf16 %v1065, %v1065
        %v1102 = vlaneseq
        %v1103 = vshrl.u32 %v1102, 7
        %v1104 = vsub.s32 0, %v1103
        %v1105 = vrot.slane %v1098, %v1104
        %v1139 = vunpack.c.l.b16 %v1066
        %v1140 = vunpack.c.l.b16 %v1067
        %v1141 = vunpack.c.l.b16 %v1068
        %v1142 = vunpack.c.l.b16 %v1069
        %v1143 = vunpack.c.l.b16 %v1070
        %v1144 = vunpack.c.l.b16 %v1071
        %v1145 = vunpack.c.l.b16 %v1072
        %v1146 = vunpack.c.l.b16 %v1073
        %v1147 = vunpack.c.l.b16 %v1074
        %v1148 = vunpack.c.l.b16 %v1075
        %v1149 = vunpack.c.l.b16 %v1076
        %v1150 = vunpack.c.l.b16 %v1077
        %v1151 = vunpack.c.l.b16 %v1078
        %v1152 = vunpack.c.l.b16 %v1079
        %v1153 = vunpack.c.l.b16 %v1080
        %v1154 = vunpack.c.l.b16 %v1081
        %v1155 = vunpack.c.l.b16 %v1082
        %v1156 = vunpack.c.l.b16 %v1083
        %v1157 = vunpack.c.l.b16 %v1084
        %v1158 = vunpack.c.l.b16 %v1085
        %v1159 = vunpack.c.l.b16 %v1086
        %v1160 = vunpack.c.l.b16 %v1087
        %v1161 = vunpack.c.l.b16 %v1088
        %v1162 = vunpack.c.l.b16 %v1089
        %v1163 = vunpack.c.l.b16 %v1090
        %v1164 = vunpack.c.l.b16 %v1091
        %v1165 = vunpack.c.l.b16 %v1092
        %v1166 = vunpack.c.l.b16 %v1093
        %v1167 = vunpack.c.l.b16 %v1094
        %v1168 = vunpack.c.l.b16 %v1095
        %v1169 = vunpack.c.l.b16 %v1096
        %v1170 = vunpack.c.l.b16 %v1097
        %v1171 = vpack.c.b16 %v1140, %v1139
        %v1172 = vpack.c.b16 %v1142, %v1141
        %v1173 = vpack.c.b16 %v1144, %v1143
        %v1174 = vpack.c.b16 %v1146, %v1145
        %v1175 = vpack.c.b16 %v1148, %v1147
        %v1176 = vpack.c.b16 %v1150, %v1149
        %v1177 = vpack.c.b16 %v1152, %v1151
        %v1178 = vpack.c.b16 %v1154, %v1153
        %v1179 = vpack.c.b16 %v1156, %v1155
        %v1180 = vpack.c.b16 %v1158, %v1157
        %v1181 = vpack.c.b16 %v1160, %v1159
        %v1182 = vpack.c.b16 %v1162, %v1161
        %v1183 = vpack.c.b16 %v1164, %v1163
        %v1184 = vpack.c.b16 %v1166, %v1165
        %v1185 = vpack.c.b16 %v1168, %v1167
        %v1186 = vpack.c.b16 %v1170, %v1169
        %1203 = vmatprep.subr.bf16.mxu0 0
        %1204 = vmatpush1.bf16.msra.mxu0 %v1178
        %1205 = vmatprep.subr.bf16.mxu0 0
        %1206 = vmatpush1.bf16.msra.mxu0 %v1177
        %1207 = vmatprep.subr.bf16.mxu0 0
        %1208 = vmatpush1.bf16.msra.mxu0 %v1176
        %1209 = vmatprep.subr.bf16.mxu0 0
        %1210 = vmatpush1.bf16.msra.mxu0 %v1175
        %1211 = vmatprep.subr.bf16.mxu0 0
        %1212 = vmatpush1.bf16.msra.mxu0 %v1174
        %1213 = vmatprep.subr.bf16.mxu0 0
        %1214 = vmatpush1.bf16.msra.mxu0 %v1173
        %1215 = vmatprep.subr.bf16.mxu0 0
        %1216 = vmatpush1.bf16.msra.mxu0 %v1172
        %1217 = vmatprep.subr.bf16.mxu0 0
        %1218 = vmatpush1.bf16.msra.mxu0 %v1171
        %1219 = vmatprep.subr.bf16.mxu0 0
        %1220 = vmatpush2.bf16.msra.mxu0 %v1186
        %1221 = vmatprep.subr.bf16.mxu0 0
        %1222 = vmatpush2.bf16.msra.mxu0 %v1185
        %1223 = vmatprep.subr.bf16.mxu0 0
        %1224 = vmatpush2.bf16.msra.mxu0 %v1184
        %1225 = vmatprep.subr.bf16.mxu0 0
        %1226 = vmatpush2.bf16.msra.mxu0 %v1183
        %1227 = vmatprep.subr.bf16.mxu0 0
        %1228 = vmatpush2.bf16.msra.mxu0 %v1182
        %1229 = vmatprep.subr.bf16.mxu0 0
        %1230 = vmatpush2.bf16.msra.mxu0 %v1181
        %1231 = vmatprep.subr.bf16.mxu0 0
        %1232 = vmatpush2.bf16.msra.mxu0 %v1180
        %1233 = vmatprep.subr.bf16.mxu0 0
        %1234 = vmatpush2.bf16.msra.mxu0 %v1179
        %1235 = vmatprep.mubr.bf16.mxu0 %v1100
        %1236 = vmatmul.mubr.bf16.gmra.mxu0 %v1099
        %v1237 = vpop.f32.mrf.mxu0
        %v1238 = vadd.f32 %v1105, %v1237
        %v1239 = vpop.f32.mrf.mxu0
        %v1240 = vpop.f32.mrf.mxu0
        %v1241 = vpop.f32.mrf.mxu0
        %1242 = vdwg.mxu0
        %v1243 = vmax.f32 %v1238, 0.0
        %v1244 = vld [vmem:[%s641] sm:$0xf]
        %v1245 = vld [vmem:[%s641 + $0x4] sm:$0xf]
        %v1246 = vld [vmem:[%s641 + $0x8] sm:$0xf]
        %v1247 = vld [vmem:[%s641 + $0xc] sm:$0xf]
        %v1248 = vld [vmem:[%s641 + $0x10] sm:$0xf]
        %v1249 = vld [vmem:[%s641 + $0x14] sm:$0xf]
        %v1250 = vld [vmem:[%s641 + $0x18] sm:$0xf]
        %v1251 = vld [vmem:[%s641 + $0x1c] sm:$0xf]
        %v1252 = vld [vmem:[%s641 + $0x20] sm:$0xf]
        %v1253 = vld [vmem:[%s641 + $0x24] sm:$0xf]
        %v1254 = vld [vmem:[%s641 + $0x28] sm:$0xf]
        %v1255 = vld [vmem:[%s641 + $0x2c] sm:$0xf]
        %v1256 = vld [vmem:[%s641 + $0x30] sm:$0xf]
        %v1257 = vld [vmem:[%s641 + $0x34] sm:$0xf]
        %v1258 = vld [vmem:[%s641 + $0x38] sm:$0xf]
        %v1259 = vld [vmem:[%s641 + $0x3c] sm:$0xf]
        %v1260 = vld [vmem:[%s644] sm:$0x1]
        %v1261 = vpack.c.bf16 %v1243, %v1243
        %v1263 = vlaneseq
        %v1264 = vshrl.u32 %v1263, 7
        %v1265 = vsub.s32 0, %v1264
        %v1266 = vrot.slane %v1260, %v1265
        %v1284 = vunpack.c.l.b16 %v1244
        %v1285 = vunpack.c.l.b16 %v1245
        %v1286 = vunpack.c.l.b16 %v1246
        %v1287 = vunpack.c.l.b16 %v1247
        %v1288 = vunpack.c.l.b16 %v1248
        %v1289 = vunpack.c.l.b16 %v1249
        %v1290 = vunpack.c.l.b16 %v1250
        %v1291 = vunpack.c.l.b16 %v1251
        %v1292 = vunpack.c.l.b16 %v1252
        %v1293 = vunpack.c.l.b16 %v1253
        %v1294 = vunpack.c.l.b16 %v1254
        %v1295 = vunpack.c.l.b16 %v1255
        %v1296 = vunpack.c.l.b16 %v1256
        %v1297 = vunpack.c.l.b16 %v1257
        %v1298 = vunpack.c.l.b16 %v1258
        %v1299 = vunpack.c.l.b16 %v1259
        %v1300 = vpack.c.b16 %v1285, %v1284
        %v1301 = vpack.c.b16 %v1287, %v1286
        %v1302 = vpack.c.b16 %v1289, %v1288
        %v1303 = vpack.c.b16 %v1291, %v1290
        %v1304 = vpack.c.b16 %v1293, %v1292
        %v1305 = vpack.c.b16 %v1295, %v1294
        %v1306 = vpack.c.b16 %v1297, %v1296
        %v1307 = vpack.c.b16 %v1299, %v1298
        %1316 = vmatprep.subr.bf16.mxu0 0
        %1317 = vmatpush1.bf16.msra.mxu0 %v1307
        %1318 = vmatprep.subr.bf16.mxu0 0
        %1319 = vmatpush1.bf16.msra.mxu0 %v1306
        %1320 = vmatprep.subr.bf16.mxu0 0
        %1321 = vmatpush1.bf16.msra.mxu0 %v1305
        %1322 = vmatprep.subr.bf16.mxu0 0
        %1323 = vmatpush1.bf16.msra.mxu0 %v1304
        %1324 = vmatprep.subr.bf16.mxu0 0
        %1325 = vmatpush1.bf16.msra.mxu0 %v1303
        %1326 = vmatprep.subr.bf16.mxu0 0
        %1327 = vmatpush1.bf16.msra.mxu0 %v1302
        %1328 = vmatprep.subr.bf16.mxu0 0
        %1329 = vmatpush1.bf16.msra.mxu0 %v1301
        %1330 = vmatprep.subr.bf16.mxu0 0
        %1331 = vmatpush1.bf16.msra.mxu0 %v1300
        %1332 = vmatprep.subr.bf16.mxu0 0
        %1333 = vmatpush2.bf16.msra.mxu0 0
        %1334 = vmatprep.subr.bf16.mxu0 0
        %1335 = vmatpush2.bf16.msra.mxu0 0
        %1336 = vmatprep.subr.bf16.mxu0 0
        %1337 = vmatpush2.bf16.msra.mxu0 0
        %1338 = vmatprep.subr.bf16.mxu0 0
        %1339 = vmatpush2.bf16.msra.mxu0 0
        %1340 = vmatprep.subr.bf16.mxu0 0
        %1341 = vmatpush2.bf16.msra.mxu0 0
        %1342 = vmatprep.subr.bf16.mxu0 0
        %1343 = vmatpush2.bf16.msra.mxu0 0
        %1344 = vmatprep.subr.bf16.mxu0 0
        %1345 = vmatpush2.bf16.msra.mxu0 0
        %1346 = vmatprep.subr.bf16.mxu0 0
        %1347 = vmatpush2.bf16.msra.mxu0 0
        %1348 = vmatprep.mubr.bf16.mxu0 0
        %1349 = vmatmul.mubr.bf16.gmra.mxu0 %v1261
        %v1350 = vpop.f32.mrf.mxu0
        %v1351 = vadd.f32 %v1266, %v1350
        %v1352 = vpop.f32.mrf.mxu0
        %v1353 = vpop.f32.mrf.mxu0
        %v1354 = vpop.f32.mrf.mxu0
        %1355 = vdwg.mxu0
        %v1356 = vmax.f32 %v1351, 0.0
        %v1357 = vld [vmem:[%s649] sm:$0xf]
        %v1358 = vld [vmem:[%s649 + $0x4] sm:$0xf]
        %v1359 = vld [vmem:[%s649 + $0x8] sm:$0xf]
        %v1360 = vld [vmem:[%s649 + $0xc] sm:$0xf]
        %v1361 = vld [vmem:[%s649 + $0x10] sm:$0xf]
        %v1362 = vld [vmem:[%s649 + $0x14] sm:$0xf]
        %v1363 = vld [vmem:[%s649 + $0x18] sm:$0xf]
        %v1364 = vld [vmem:[%s649 + $0x1c] sm:$0xf]
        %v1365 = vld [vmem:[%s649 + $0x20] sm:$0xf]
        %v1366 = vld [vmem:[%s649 + $0x24] sm:$0xf]
        %v1367 = vld [vmem:[%s649 + $0x28] sm:$0xf]
        %v1368 = vld [vmem:[%s649 + $0x2c] sm:$0xf]
        %v1369 = vld [vmem:[%s652] sm:$0x1]
        %v1370 = vpack.c.bf16 %v1356, %v1356
        %v1372 = vlaneseq
        %v1373 = vshrl.u32 %v1372, 7
        %v1374 = vsub.s32 0, %v1373
        %v1375 = vrot.slane %v1369, %v1374
        %v1389 = vunpack.c.l.b16 %v1357
        %v1390 = vunpack.c.l.b16 %v1358
        %v1391 = vunpack.c.l.b16 %v1359
        %v1392 = vunpack.c.l.b16 %v1360
        %v1393 = vunpack.c.l.b16 %v1361
        %v1394 = vunpack.c.l.b16 %v1362
        %v1395 = vunpack.c.l.b16 %v1363
        %v1396 = vunpack.c.l.b16 %v1364
        %v1397 = vunpack.c.l.b16 %v1365
        %v1398 = vunpack.c.l.b16 %v1366
        %v1399 = vunpack.c.l.b16 %v1367
        %v1400 = vunpack.c.l.b16 %v1368
        %v1401 = vpack.c.b16 %v1390, %v1389
        %v1402 = vpack.c.b16 %v1392, %v1391
        %v1403 = vpack.c.b16 %v1394, %v1393
        %v1404 = vpack.c.b16 %v1396, %v1395
        %v1405 = vpack.c.b16 %v1398, %v1397
        %v1406 = vpack.c.b16 %v1400, %v1399
        %vm1413 = vcmask 785408
        %v1415 = vsel %vm1413, %v1370, 0
        %1417 = vmatprep.subr.bf16.mxu0 0
        %1418 = vmatpush1.bf16.msra.mxu0 0
        %1419 = vmatprep.subr.bf16.mxu0 0
        %1420 = vmatpush1.bf16.msra.mxu0 0
        %1421 = vmatprep.subr.bf16.mxu0 0
        %1422 = vmatpush1.bf16.msra.mxu0 %v1406
        %1423 = vmatprep.subr.bf16.mxu0 0
        %1424 = vmatpush1.bf16.msra.mxu0 %v1405
        %1425 = vmatprep.subr.bf16.mxu0 0
        %1426 = vmatpush1.bf16.msra.mxu0 %v1404
        %1427 = vmatprep.subr.bf16.mxu0 0
        %1428 = vmatpush1.bf16.msra.mxu0 %v1403
        %1429 = vmatprep.subr.bf16.mxu0 0
        %1430 = vmatpush1.bf16.msra.mxu0 %v1402
        %1431 = vmatprep.subr.bf16.mxu0 0
        %1432 = vmatpush1.bf16.msra.mxu0 %v1401
        %1433 = vmatprep.subr.bf16.mxu0 0
        %1434 = vmatpush2.bf16.msra.mxu0 0
        %1435 = vmatprep.subr.bf16.mxu0 0
        %1436 = vmatpush2.bf16.msra.mxu0 0
        %1437 = vmatprep.subr.bf16.mxu0 0
        %1438 = vmatpush2.bf16.msra.mxu0 0
        %1439 = vmatprep.subr.bf16.mxu0 0
        %1440 = vmatpush2.bf16.msra.mxu0 0
        %1441 = vmatprep.subr.bf16.mxu0 0
        %1442 = vmatpush2.bf16.msra.mxu0 0
        %1443 = vmatprep.subr.bf16.mxu0 0
        %1444 = vmatpush2.bf16.msra.mxu0 0
        %1445 = vmatprep.subr.bf16.mxu0 0
        %1446 = vmatpush2.bf16.msra.mxu0 0
        %1447 = vmatprep.subr.bf16.mxu0 0
        %1448 = vmatpush2.bf16.msra.mxu0 0
        %1449 = vmatprep.mubr.bf16.mxu0 0
        %1450 = vmatmul.mubr.bf16.gmra.mxu0 %v1415
        %v1451 = vpop.f32.mrf.mxu0
        %v1452 = vadd.f32 %v1375, %v1451
        %v1453 = vpop.f32.mrf.mxu0
        %v1454 = vpop.f32.mrf.mxu0
        %v1455 = vpop.f32.mrf.mxu0
        %1456 = vdwg.mxu0
        %v1457 = vmax.f32 %v1452, 0.0
        %v1458 = vld [vmem:[%s655] sm:$0x1]
        %v1459 = vunpack.c.l.bf16 %v1458
        %v1460 = vld [vmem:[%s658] sm:$0x1]
        %v1461 = vlaneseq
        %v1462 = vshrl.u32 %v1461, 7
        %v1463 = vsub.s32 0, %v1462
        %v1464 = vrot.slane %v1459, %v1463
        %v1465 = vmul.f32 %v1457, %v1464
        %vm1466 = vcmask 517120
        %v1467 = vsel %vm1466, %v1465, 0.0
        %1468 = vadd.xlane.f32.xlu0 %v1467
        %v1469 = vpop.xlane.xlu0 %1468
        %v1471 = vlaneseq
        %v1472 = vshrl.u32 %v1471, 7
        %v1473 = vsub.s32 0, %v1472
        %v1474 = vrot.slane %v1460, %v1473
        %v1476 = vadd.f32 %v1469, %v1474
        %v1477 = vsub.f32 0.0, %v1476
        %v1478 = vmul.f32 %v1477, 1.442695
        %v1479 = vpow.pop %v1478
        %v1480 = vadd.f32 %v1479, 1.0
        %v1481 = vrcp.pop %v1480
        %v1482 = vmul.f32 1.0, %v1481
        %vm1483 = vcmask 1024
        %1484 = vst.msk [vmem:[%s662] sm:$0x3] %vm1483, %v1482
        %p1485 = scmp.lt.s32.totalorder %s30, 3
        %s1486 = scalar_select %p1485, %s30, 3
        %s1487 = smul.addr %s1486, 2
        %s1488 = scalar_lea.vmem %s13, %s1487
        // Predicated region
        $region81: #{tpu_custom_call.1} parent=71 // pred_check
          %p1489 = pneg %p381
        $region82: #{tpu_custom_call.1} parent=71 // pred_check_branch
          %1491 = sbr.rel (%p1489) target = $region84
        $region83: #{tpu_custom_call.1} parent=71 // pred_region
          _
        $region84: #{tpu_custom_call.1} parent=71 // pred_fallthru
          _
      $region72: #{tpu_custom_call.1} parent=5 // pred_fallthru
        _
      %p1492 = scmp.le.s32.totalorder 2, %s25
      // Predicated region
      $region85: #{tpu_custom_call.1} parent=5 // pred_check
        %p1493 = pneg %p1492
      $region86: #{tpu_custom_call.1} parent=5 // pred_check_branch
        %1495 = sbr.rel (%p1493) target = $region88
      $region87: #{tpu_custom_call.1} parent=5 // pred_region
        %s1496 = ssub.s32 %s25, 2
        // Predicated region
        $region89: #{tpu_custom_call.1} parent=87 // pred_check
          %p1497 = pneg %p387
        $region90: #{tpu_custom_call.1} parent=87 // pred_check_branch
          %1499 = sbr.rel (%p1497) target = $region92
        $region91: #{tpu_custom_call.1} parent=87 // pred_region
          %p1500 = scmp.lt.s32.totalorder %s31, 3
          %s1501 = scalar_select %p1500, %s31, 3
          %s1502 = smul.addr %s1501, 2
          %s1503 = scalar_lea.vmem %s13, %s1502
        $region92: #{tpu_custom_call.1} parent=87 // pred_fallthru
          _
      $region88: #{tpu_custom_call.1} parent=5 // pred_fallthru
        _
    $region6: #{tpu_custom_call.1} parent=1 // loop_footer
      %s29 = sadd.s32 1, %s25
    $region7: #{tpu_custom_call.1} parent=1 // loop_footer_branch
      %24 = sbr.rel target = $region3
    $region8: #{tpu_custom_call.1} parent=1 // loop_exit
      _
    %1504 = vsyncpa [#allocation3], 1
    %s1505 = scalar_lea.sflag [#allocation3], 1
    %1506 = vsyncpa %s1505, 1
    %1507 = vsyncpa [#allocation5], 1
    %s1508 = scalar_lea.sflag [#allocation5], 1
    %1509 = vsyncpa %s1508, 1

</llo_original>
